<compile_context>
chip_gen: v7x
topology: tpu7x:2x2x1
jax: 0.10.0
libtpu: 0.0.40
codegen_flags: <defaults>
</compile_context>

<pallas_src>
import jax
import jax.numpy as jnp
from jax.experimental import pallas as pl
from jax.experimental.pallas import tpu as pltpu

F32 = jnp.float32
BF16 = jnp.bfloat16
DP = 128  # lane-dense padded output feature width


def gnn_kernel(x_ref, a_ref, p_ref,
               w_emb_ref, b_emb_ref,
               w_cat_ref, b_msg_ref,
               w_up_m_ref, b_up1_ref,
               w_up2_ref, b_up2_ref,
               bn_sum_ref, bg_sum_ref,
               node_out_ref, graph_out_ref):
    TN = x_ref.shape[1]
    TG = p_ref.shape[1]
    D = w_emb_ref.shape[1]
    L = w_up_m_ref.shape[0]

    x = x_ref[0]          # [TN, F]    f32 (K=4 sliver; keep input embedding exact)
    A = a_ref[0]          # [TN, TN]   bf16 block-diagonal adjacency for this tile
    P = p_ref[0]          # [TG, TN]   bf16 one-hot pooling (rows padded with zeros)

    # input node embedding (linear DiscreteEmbedding)
    h = jnp.dot(x, w_emb_ref[...], preferred_element_type=F32) + b_emb_ref[...]

    # acc[:, :D] = sum_i h_i @ wn[i]   (node branch, pre-bias)
    # acc[:, D:] = sum_i h_i @ wg[i]   (graph branch, pre-pooling, pre-bias)
    acc = jnp.zeros((TN, 2 * D), F32)

    for i in range(L + 1):
        # one fused 128-lane matmul: W_cat[i] = [w_msg | w_up_x | wn | wg]
        z = jnp.dot(h.astype(BF16), w_cat_ref[i], preferred_element_type=F32)
        acc = acc + z[:, 2 * D:]
        if i < L:
            # MPNN conv layer i (GIN-style; see TODO(synk) above)
            msg = jnp.maximum(z[:, :D] + b_msg_ref[i], 0.0)
            # TODO(synk): dense neighbor aggregation; use sparse gather for large N.
            m = jnp.dot(A, msg.astype(BF16), preferred_element_type=F32)
            hid = jnp.maximum(
                z[:, D:2 * D]
                + jnp.dot(m.astype(BF16), w_up_m_ref[i],
                          preferred_element_type=F32)
                + b_up1_ref[i], 0.0)
            upd = (jnp.dot(hid.astype(BF16), w_up2_ref[i],
                           preferred_element_type=F32) + b_up2_ref[i])
            # bn[i] is False -> skip; activation = ReLU; dropout p=0 -> identity
            h = jnp.maximum(upd, 0.0)

    node_vals = acc[:, :D] + bn_sum_ref[...]                     # [TN, D]
    pooled = (jnp.dot(P, acc[:, D:].astype(BF16),
                      preferred_element_type=F32) + bg_sum_ref[...])  # [TG, D]

    # lane-dense (128-wide, unmasked) stores; wrapper slices back to D columns
    node_out_ref[0] = jnp.concatenate(
        [node_vals, jnp.zeros((TN, DP - D), F32)], axis=-1)
    graph_out_ref[0] = jnp.concatenate(
        [pooled, jnp.zeros((TG, DP - D), F32)], axis=-1)


def pack_weights(params):
    """Fuse per-layer h-matmul weights, cast matmul operands to bf16,
    pre-sum output-projection biases."""
    L, D, _ = params['w_msg'].shape
    zeros = jnp.zeros((1, D, D), F32)
    w_msg_ext = jnp.concatenate([params['w_msg'], zeros], axis=0)   # [L+1,D,D]
    w_upx_ext = jnp.concatenate([params['w_up_x'], zeros], axis=0)  # [L+1,D,D]
    w_cat = jnp.concatenate(
        [w_msg_ext, w_upx_ext, params['wn'], params['wg']], axis=-1)  # [L+1,D,4D]
    return {
        'w_emb': params['w_emb'],                 # f32 (tiny K=4 embedding)
        'b_emb': params['b_emb'],
        'w_cat': w_cat.astype(BF16),
        'b_msg': params['b_msg'],
        'w_up_m': params['w_up_m'].astype(BF16),
        'b_up1': params['b_up1'],
        'w_up2': params['w_up2'].astype(BF16),
        'b_up2': params['b_up2'],
        'bn_sum': params['bn'].sum(axis=0),       # [1, D]
        'bg_sum': params['bg'].sum(axis=0),       # [1, D]
    }


def neural_part_gnn_forward(x_blocks, a_blocks, p_blocks, packed):
    """x_blocks [T,TN,F], a_blocks [T,TN,TN], p_blocks [T,TG,TN] (graphs packed
    into T node tiles of TN nodes, TG graphs per tile)."""
    T, TN, F_in = x_blocks.shape
    TG = p_blocks.shape[1]
    D = packed['w_emb'].shape[1]
    L = packed['w_up_m'].shape[0]
    assert TN % 8 == 0, "node tile must be a multiple of 8 sublanes"

    # pad the pooling rows to a multiple of 8 sublanes
    TGP = ((TG + 7) // 8) * 8
    if TGP != TG:
        p_blocks = jnp.concatenate(
            [p_blocks, jnp.zeros((T, TGP - TG, TN), p_blocks.dtype)], axis=1)

    def tile_spec(shape):
        nd = len(shape)
        return pl.BlockSpec((1,) + tuple(shape[1:]),
                            lambda t: (t,) + (0,) * (nd - 1))

    def full_spec(arr):
        nd = arr.ndim
        return pl.BlockSpec(arr.shape, lambda t: (0,) * nd)

    args = (x_blocks, a_blocks.astype(BF16), p_blocks.astype(BF16),
            packed['w_emb'], packed['b_emb'],
            packed['w_cat'], packed['b_msg'],
            packed['w_up_m'], packed['b_up1'],
            packed['w_up2'], packed['b_up2'],
            packed['bn_sum'], packed['bg_sum'])

    in_specs = ([tile_spec(args[0].shape), tile_spec(args[1].shape),
                 tile_spec(args[2].shape)]
                + [full_spec(a) for a in args[3:]])

    out_shapes = (jax.ShapeDtypeStruct((T, TN, DP), F32),
                  jax.ShapeDtypeStruct((T, TGP, DP), F32))
    out_specs = [tile_spec((T, TN, DP)), tile_spec((T, TGP, DP))]

    # rough cost model (advisory, for XLA scheduling around the custom call)
    flops = T * (2 * TN * F_in * D
                 + (L + 1) * 2 * TN * D * (4 * D)
                 + L * (2 * TN * TN * D + 2 * TN * D * D)
                 + 2 * TGP * TN * D)
    bytes_accessed = (sum(int(a.size) * a.dtype.itemsize for a in args)
                      + T * (TN + TGP) * DP * 4)
    cost = pl.CostEstimate(flops=flops, transcendentals=0,
                           bytes_accessed=bytes_accessed)

    node_pad, graph_pad = pl.pallas_call(
        gnn_kernel,
        out_shape=out_shapes,
        grid_spec=pltpu.PrefetchScalarGridSpec(
            num_scalar_prefetch=0,
            grid=(T,),
            in_specs=in_specs,
            out_specs=out_specs),
        compiler_params=pltpu.CompilerParams(
            dimension_semantics=("parallel",)),
        cost_estimate=cost,
    )(*args)

    node_out = node_pad[:, :, :D].reshape(T * TN, D)
    graph_out = graph_pad[:, :TG, :D].reshape(T * TG, D)
    return node_out, graph_out


def reference_forward(x, A, P, params):
    """Pure-JAX f32 reference with the module's exact math."""
    h = x @ params['w_emb'] + params['b_emb']
    L = params['w_msg'].shape[0]
    node_acc = 0.0
    graph_acc = 0.0
    for i in range(L + 1):
        node_acc = node_acc + h @ params['wn'][i] + params['bn'][i]
        graph_acc = graph_acc + (P @ h) @ params['wg'][i] + params['bg'][i]
        if i < L:
            msg = jnp.maximum(h @ params['w_msg'][i] + params['b_msg'][i], 0.0)
            m = A @ msg
            hid = jnp.maximum(h @ params['w_up_x'][i] + m @ params['w_up_m'][i]
                              + params['b_up1'][i], 0.0)
            h = jnp.maximum(hid @ params['w_up2'][i] + params['b_up2'][i], 0.0)
    return node_acc, graph_acc


def reference_forward_bf16(x, A, P, params):
    """Pure-JAX reference with the same bf16 operand rounding as the kernel."""
    c = lambda a: a.astype(BF16)
    dot = lambda a, b: jnp.dot(a, b, preferred_element_type=F32)
    h = dot(x, params['w_emb']) + params['b_emb']
    L = params['w_msg'].shape[0]
    node_acc = 0.0
    g_pre = 0.0
    for i in range(L + 1):
        node_acc = node_acc + dot(c(h), c(params['wn'][i]))
        g_pre = g_pre + dot(c(h), c(params['wg'][i]))
        if i < L:
            msg = jnp.maximum(dot(c(h), c(params['w_msg'][i]))
                              + params['b_msg'][i], 0.0)
            m = dot(c(A), c(msg))
            hid = jnp.maximum(dot(c(h), c(params['w_up_x'][i]))
                              + dot(c(m), c(params['w_up_m'][i]))
                              + params['b_up1'][i], 0.0)
            h = jnp.maximum(dot(c(hid), c(params['w_up2'][i]))
                            + params['b_up2'][i], 0.0)
    node_out = node_acc + params['bn'].sum(0)
    graph_out = dot(c(P), c(g_pre)) + params['bg'].sum(0)
    return node_out, graph_out


def init_params(key, F_in, D, L):
    def dense(k, shape):
        fan_in = shape[-2]
        return jax.random.normal(k, shape, F32) / jnp.sqrt(jnp.float32(fan_in))

    ks = jax.random.split(key, 16)
    return {
        'w_emb':  dense(ks[0], (F_in, D)),
        'b_emb':  jnp.zeros((1, D), F32),
        'w_msg':  dense(ks[1], (L, D, D)),
        'b_msg':  0.01 * jax.random.normal(ks[2], (L, 1, D), F32),
        'w_up_x': dense(ks[3], (L, D, D)),
        'w_up_m': dense(ks[4], (L, D, D)),
        'b_up1':  0.01 * jax.random.normal(ks[5], (L, 1, D), F32),
        'w_up2':  dense(ks[6], (L, D, D)),
        'b_up2':  0.01 * jax.random.normal(ks[7], (L, 1, D), F32),
        'wn':     dense(ks[8], (L + 1, D, D)),
        'bn':     0.01 * jax.random.normal(ks[9], (L + 1, 1, D), F32),
        'wg':     dense(ks[10], (L + 1, D, D)),
        'bg':     0.01 * jax.random.normal(ks[11], (L + 1, 1, D), F32),
    }


if __name__ == "__main__":
    key = jax.random.PRNGKey(0)
    k_x, k_p = jax.random.split(key)

    n_per_graph = 8      # nodes per graph
    G = 2                # graphs in batch
    graphs_per_tile = 1  # graphs per grid tile (block-diagonal A per tile)
    F_in = 4             # d_in_node_features
    D = 32               # d_out_node_embedding = d_msg = d_h = d_out[-1]
    L = 2                # number of conv layers

    T = G // graphs_per_tile
    TN = graphs_per_tile * n_per_graph
    N = G * n_per_graph

    # node features
    x = jax.random.normal(k_x, (N, F_in), F32)

    # symmetric ring adjacency within each graph
    idx = jnp.arange(n_per_graph)
    diff = (idx[:, None] - idx[None, :]) % n_per_graph
    A_single = ((diff == 1) | (diff == n_per_graph - 1)).astype(F32)     # [n, n]

    # full dense operands (for the pure-JAX references)
    A_full = jnp.kron(jnp.eye(G, dtype=F32), A_single)                   # [N, N]
    batch = jnp.repeat(jnp.arange(G), n_per_graph)
    P_full = jax.nn.one_hot(batch, G, dtype=F32).T                       # [G, N]

    # tiled operands for the kernel (graphs packed contiguously per tile)
    x_blocks = x.reshape(T, TN, F_in)
    A_tile = jnp.kron(jnp.eye(graphs_per_tile, dtype=F32), A_single)     # [TN, TN]
    A_blocks = jnp.broadcast_to(A_tile, (T, TN, TN))
    batch_in_tile = jnp.repeat(jnp.arange(graphs_per_tile), n_per_graph)
    P_tile = jax.nn.one_hot(batch_in_tile, graphs_per_tile, dtype=F32).T  # [TG, TN]
    P_blocks = jnp.broadcast_to(P_tile, (T, graphs_per_tile, TN))

    params = init_params(k_p, F_in, D, L)
    packed = pack_weights(params)

    node_out, graph_out = neural_part_gnn_forward(x_blocks, A_blocks, P_blocks,
                                                  packed)
    jax.block_until_ready((node_out, graph_out))

    ref_node_f32, ref_graph_f32 = reference_forward(x, A_full, P_full, params)
    ref_node_bf, ref_graph_bf = reference_forward_bf16(x, A_full, P_full, params)

    assert node_out.shape == (N, D) and graph_out.shape == (G, D)
    # exact-translation check (same bf16 operand rounding as the kernel)
    assert jnp.allclose(node_out, ref_node_bf, atol=1e-3, rtol=1e-3)
    assert jnp.allclose(graph_out, ref_graph_bf, atol=1e-3, rtol=1e-3)
    # module-semantics check (f32 reference; allow bf16 operand quantization)
    assert jnp.allclose(node_out, ref_node_f32, atol=1e-1, rtol=5e-2)
    assert jnp.allclose(graph_out, ref_graph_f32, atol=1e-1, rtol=5e-2)

    print("KERNEL_OK")
</pallas_src>

<mosaic_0001>
module attributes {stable_mosaic.version = 11 : i64} {
  func.func @gnn_kernel(%arg0: i32, %arg1: memref<1x8x4xf32, #tpu.memory_space<vmem>>, %arg2: memref<1x8x8xbf16, #tpu.memory_space<vmem>>, %arg3: memref<1x8x8xbf16, #tpu.memory_space<vmem>>, %arg4: memref<4x32xf32, #tpu.memory_space<vmem>>, %arg5: memref<1x32xf32, #tpu.memory_space<vmem>>, %arg6: memref<3x32x128xbf16, #tpu.memory_space<vmem>>, %arg7: memref<2x1x32xf32, #tpu.memory_space<vmem>>, %arg8: memref<2x32x32xbf16, #tpu.memory_space<vmem>>, %arg9: memref<2x1x32xf32, #tpu.memory_space<vmem>>, %arg10: memref<2x32x32xbf16, #tpu.memory_space<vmem>>, %arg11: memref<2x1x32xf32, #tpu.memory_space<vmem>>, %arg12: memref<1x32xf32, #tpu.memory_space<vmem>>, %arg13: memref<1x32xf32, #tpu.memory_space<vmem>>, %arg14: memref<1x8x128xf32, #tpu.memory_space<vmem>>, %arg15: memref<1x8x128xf32, #tpu.memory_space<vmem>>) attributes {dimension_semantics = [#tpu.dimension_semantics<parallel>], iteration_bounds = array<i64: 2>, scalar_prefetch = 0 : i64, scratch_operands = 0 : i64, tpu.core_type = #tpu.core_type<tc>, window_params = [{transform_indices = @transform_0, window_bounds = array<i64: 1, 8, 4>}, {transform_indices = @transform_1, window_bounds = array<i64: 1, 8, 8>}, {transform_indices = @transform_2, window_bounds = array<i64: 1, 8, 8>}, {pipeline_mode = #tpu.pipeline_mode<synchronous>, transform_indices = @transform_3, window_bounds = array<i64: 4, 32>}, {pipeline_mode = #tpu.pipeline_mode<synchronous>, transform_indices = @transform_4, window_bounds = array<i64: 1, 32>}, {pipeline_mode = #tpu.pipeline_mode<synchronous>, transform_indices = @transform_5, window_bounds = array<i64: 3, 32, 128>}, {pipeline_mode = #tpu.pipeline_mode<synchronous>, transform_indices = @transform_6, window_bounds = array<i64: 2, 1, 32>}, {pipeline_mode = #tpu.pipeline_mode<synchronous>, transform_indices = @transform_7, window_bounds = array<i64: 2, 32, 32>}, {pipeline_mode = #tpu.pipeline_mode<synchronous>, transform_indices = @transform_8, window_bounds = array<i64: 2, 1, 32>}, {pipeline_mode = #tpu.pipeline_mode<synchronous>, transform_indices = @transform_9, window_bounds = array<i64: 2, 32, 32>}, {pipeline_mode = #tpu.pipeline_mode<synchronous>, transform_indices = @transform_10, window_bounds = array<i64: 2, 1, 32>}, {pipeline_mode = #tpu.pipeline_mode<synchronous>, transform_indices = @transform_11, window_bounds = array<i64: 1, 32>}, {pipeline_mode = #tpu.pipeline_mode<synchronous>, transform_indices = @transform_12, window_bounds = array<i64: 1, 32>}, {transform_indices = @transform_13, window_bounds = array<i64: 1, 8, 128>}, {transform_indices = @transform_14, window_bounds = array<i64: 1, 8, 128>}]} {
    %c0 = arith.constant 0 : index
    %c0_0 = arith.constant 0 : index
    %c0_1 = arith.constant 0 : index
    %0 = vector.load %arg1[%c0, %c0_0, %c0_1] : memref<1x8x4xf32, #tpu.memory_space<vmem>>, vector<1x8x4xf32>
    %1 = vector.shape_cast %0 : vector<1x8x4xf32> to vector<8x4xf32>
    %c0_2 = arith.constant 0 : index
    %c0_3 = arith.constant 0 : index
    %c0_4 = arith.constant 0 : index
    %2 = vector.load %arg2[%c0_2, %c0_3, %c0_4] : memref<1x8x8xbf16, #tpu.memory_space<vmem>>, vector<1x8x8xbf16>
    %3 = vector.shape_cast %2 : vector<1x8x8xbf16> to vector<8x8xbf16>
    %c0_5 = arith.constant 0 : index
    %c0_6 = arith.constant 0 : index
    %c0_7 = arith.constant 0 : index
    %4 = vector.load %arg3[%c0_5, %c0_6, %c0_7] : memref<1x8x8xbf16, #tpu.memory_space<vmem>>, vector<1x8x8xbf16>
    %5 = vector.shape_cast %4 : vector<1x8x8xbf16> to vector<8x8xbf16>
    %c0_8 = arith.constant 0 : index
    %c0_9 = arith.constant 0 : index
    %6 = vector.load %arg4[%c0_8, %c0_9] : memref<4x32xf32, #tpu.memory_space<vmem>>, vector<4x32xf32>
    %cst = arith.constant dense<0.000000e+00> : vector<8x32xf32>
    %7 = tpu.matmul %1, %6, %cst {dimension_numbers = #tpu.dot_dimension_numbers<[1], [0], [0], [1], [0, 0, 1, 1], [], []>} : vector<8x4xf32>, vector<4x32xf32>, vector<8x32xf32> -> vector<8x32xf32>
    %c0_10 = arith.constant 0 : index
    %c0_11 = arith.constant 0 : index
    %8 = vector.load %arg5[%c0_10, %c0_11] : memref<1x32xf32, #tpu.memory_space<vmem>>, vector<1x32xf32>
    %9 = vector.broadcast %8 : vector<1x32xf32> to vector<8x32xf32>
    %10 = arith.addf %7, %9 : vector<8x32xf32>
    %cst_12 = arith.constant 0.000000e+00 : f32
    %11 = vector.broadcast %cst_12 : f32 to vector<8x64xf32>
    %12 = arith.truncf %10 : vector<8x32xf32> to vector<8x32xbf16>
    %c0_13 = arith.constant 0 : index
    %c0_14 = arith.constant 0 : index
    %c0_15 = arith.constant 0 : index
    %13 = vector.load %arg6[%c0_13, %c0_14, %c0_15] : memref<3x32x128xbf16, #tpu.memory_space<vmem>>, vector<1x32x128xbf16>
    %14 = vector.shape_cast %13 : vector<1x32x128xbf16> to vector<32x128xbf16>
    %cst_16 = arith.constant dense<0.000000e+00> : vector<8x128xf32>
    %15 = tpu.matmul %12, %14, %cst_16 {dimension_numbers = #tpu.dot_dimension_numbers<[1], [0], [0], [1], [0, 0, 1, 1], [], []>} : vector<8x32xbf16>, vector<32x128xbf16>, vector<8x128xf32> -> vector<8x128xf32>
    %16 = vector.extract_strided_slice %15 {offsets = [0, 64], sizes = [8, 64], strides = [1, 1]} : vector<8x128xf32> to vector<8x64xf32>
    %17 = arith.addf %11, %16 : vector<8x64xf32>
    %18 = vector.extract_strided_slice %15 {offsets = [0, 0], sizes = [8, 32], strides = [1, 1]} : vector<8x128xf32> to vector<8x32xf32>
    %c0_17 = arith.constant 0 : index
    %c0_18 = arith.constant 0 : index
    %c0_19 = arith.constant 0 : index
    %19 = vector.load %arg7[%c0_17, %c0_18, %c0_19] : memref<2x1x32xf32, #tpu.memory_space<vmem>>, vector<1x1x32xf32>
    %20 = vector.shape_cast %19 : vector<1x1x32xf32> to vector<1x32xf32>
    %21 = vector.broadcast %20 : vector<1x32xf32> to vector<8x32xf32>
    %22 = arith.addf %18, %21 : vector<8x32xf32>
    %cst_20 = arith.constant 0.000000e+00 : f32
    %23 = vector.broadcast %cst_20 : f32 to vector<8x32xf32>
    %24 = arith.maximumf %22, %23 : vector<8x32xf32>
    %25 = arith.truncf %24 : vector<8x32xf32> to vector<8x32xbf16>
    %cst_21 = arith.constant dense<0.000000e+00> : vector<8x32xf32>
    %26 = tpu.matmul %3, %25, %cst_21 {dimension_numbers = #tpu.dot_dimension_numbers<[1], [0], [0], [1], [0, 0, 1, 1], [], []>} : vector<8x8xbf16>, vector<8x32xbf16>, vector<8x32xf32> -> vector<8x32xf32>
    %27 = vector.extract_strided_slice %15 {offsets = [0, 32], sizes = [8, 32], strides = [1, 1]} : vector<8x128xf32> to vector<8x32xf32>
    %28 = arith.truncf %26 : vector<8x32xf32> to vector<8x32xbf16>
    %c0_22 = arith.constant 0 : index
    %c0_23 = arith.constant 0 : index
    %c0_24 = arith.constant 0 : index
    %29 = vector.load %arg8[%c0_22, %c0_23, %c0_24] : memref<2x32x32xbf16, #tpu.memory_space<vmem>>, vector<1x32x32xbf16>
    %30 = vector.shape_cast %29 : vector<1x32x32xbf16> to vector<32x32xbf16>
    %cst_25 = arith.constant dense<0.000000e+00> : vector<8x32xf32>
    %31 = tpu.matmul %28, %30, %cst_25 {dimension_numbers = #tpu.dot_dimension_numbers<[1], [0], [0], [1], [0, 0, 1, 1], [], []>} : vector<8x32xbf16>, vector<32x32xbf16>, vector<8x32xf32> -> vector<8x32xf32>
    %32 = arith.addf %27, %31 : vector<8x32xf32>
    %c0_26 = arith.constant 0 : index
    %c0_27 = arith.constant 0 : index
    %c0_28 = arith.constant 0 : index
    %33 = vector.load %arg9[%c0_26, %c0_27, %c0_28] : memref<2x1x32xf32, #tpu.memory_space<vmem>>, vector<1x1x32xf32>
    %34 = vector.shape_cast %33 : vector<1x1x32xf32> to vector<1x32xf32>
    %35 = vector.broadcast %34 : vector<1x32xf32> to vector<8x32xf32>
    %36 = arith.addf %32, %35 : vector<8x32xf32>
    %cst_29 = arith.constant 0.000000e+00 : f32
    %37 = vector.broadcast %cst_29 : f32 to vector<8x32xf32>
    %38 = arith.maximumf %36, %37 : vector<8x32xf32>
    %39 = arith.truncf %38 : vector<8x32xf32> to vector<8x32xbf16>
    %c0_30 = arith.constant 0 : index
    %c0_31 = arith.constant 0 : index
    %c0_32 = arith.constant 0 : index
    %40 = vector.load %arg10[%c0_30, %c0_31, %c0_32] : memref<2x32x32xbf16, #tpu.memory_space<vmem>>, vector<1x32x32xbf16>
    %41 = vector.shape_cast %40 : vector<1x32x32xbf16> to vector<32x32xbf16>
    %cst_33 = arith.constant dense<0.000000e+00> : vector<8x32xf32>
    %42 = tpu.matmul %39, %41, %cst_33 {dimension_numbers = #tpu.dot_dimension_numbers<[1], [0], [0], [1], [0, 0, 1, 1], [], []>} : vector<8x32xbf16>, vector<32x32xbf16>, vector<8x32xf32> -> vector<8x32xf32>
    %c0_34 = arith.constant 0 : index
    %c0_35 = arith.constant 0 : index
    %c0_36 = arith.constant 0 : index
    %43 = vector.load %arg11[%c0_34, %c0_35, %c0_36] : memref<2x1x32xf32, #tpu.memory_space<vmem>>, vector<1x1x32xf32>
    %44 = vector.shape_cast %43 : vector<1x1x32xf32> to vector<1x32xf32>
    %45 = vector.broadcast %44 : vector<1x32xf32> to vector<8x32xf32>
    %46 = arith.addf %42, %45 : vector<8x32xf32>
    %cst_37 = arith.constant 0.000000e+00 : f32
    %47 = vector.broadcast %cst_37 : f32 to vector<8x32xf32>
    %48 = arith.maximumf %46, %47 : vector<8x32xf32>
    %49 = arith.truncf %48 : vector<8x32xf32> to vector<8x32xbf16>
    %c1 = arith.constant 1 : index
    %c0_38 = arith.constant 0 : index
    %c0_39 = arith.constant 0 : index
    %50 = vector.load %arg6[%c1, %c0_38, %c0_39] : memref<3x32x128xbf16, #tpu.memory_space<vmem>>, vector<1x32x128xbf16>
    %51 = vector.shape_cast %50 : vector<1x32x128xbf16> to vector<32x128xbf16>
    %cst_40 = arith.constant dense<0.000000e+00> : vector<8x128xf32>
    %52 = tpu.matmul %49, %51, %cst_40 {dimension_numbers = #tpu.dot_dimension_numbers<[1], [0], [0], [1], [0, 0, 1, 1], [], []>} : vector<8x32xbf16>, vector<32x128xbf16>, vector<8x128xf32> -> vector<8x128xf32>
    %53 = vector.extract_strided_slice %52 {offsets = [0, 64], sizes = [8, 64], strides = [1, 1]} : vector<8x128xf32> to vector<8x64xf32>
    %54 = arith.addf %17, %53 : vector<8x64xf32>
    %55 = vector.extract_strided_slice %52 {offsets = [0, 0], sizes = [8, 32], strides = [1, 1]} : vector<8x128xf32> to vector<8x32xf32>
    %c1_41 = arith.constant 1 : index
    %c0_42 = arith.constant 0 : index
    %c0_43 = arith.constant 0 : index
    %56 = vector.load %arg7[%c1_41, %c0_42, %c0_43] : memref<2x1x32xf32, #tpu.memory_space<vmem>>, vector<1x1x32xf32>
    %57 = vector.shape_cast %56 : vector<1x1x32xf32> to vector<1x32xf32>
    %58 = vector.broadcast %57 : vector<1x32xf32> to vector<8x32xf32>
    %59 = arith.addf %55, %58 : vector<8x32xf32>
    %cst_44 = arith.constant 0.000000e+00 : f32
    %60 = vector.broadcast %cst_44 : f32 to vector<8x32xf32>
    %61 = arith.maximumf %59, %60 : vector<8x32xf32>
    %62 = arith.truncf %61 : vector<8x32xf32> to vector<8x32xbf16>
    %cst_45 = arith.constant dense<0.000000e+00> : vector<8x32xf32>
    %63 = tpu.matmul %3, %62, %cst_45 {dimension_numbers = #tpu.dot_dimension_numbers<[1], [0], [0], [1], [0, 0, 1, 1], [], []>} : vector<8x8xbf16>, vector<8x32xbf16>, vector<8x32xf32> -> vector<8x32xf32>
    %64 = vector.extract_strided_slice %52 {offsets = [0, 32], sizes = [8, 32], strides = [1, 1]} : vector<8x128xf32> to vector<8x32xf32>
    %65 = arith.truncf %63 : vector<8x32xf32> to vector<8x32xbf16>
    %c1_46 = arith.constant 1 : index
    %c0_47 = arith.constant 0 : index
    %c0_48 = arith.constant 0 : index
    %66 = vector.load %arg8[%c1_46, %c0_47, %c0_48] : memref<2x32x32xbf16, #tpu.memory_space<vmem>>, vector<1x32x32xbf16>
    %67 = vector.shape_cast %66 : vector<1x32x32xbf16> to vector<32x32xbf16>
    %cst_49 = arith.constant dense<0.000000e+00> : vector<8x32xf32>
    %68 = tpu.matmul %65, %67, %cst_49 {dimension_numbers = #tpu.dot_dimension_numbers<[1], [0], [0], [1], [0, 0, 1, 1], [], []>} : vector<8x32xbf16>, vector<32x32xbf16>, vector<8x32xf32> -> vector<8x32xf32>
    %69 = arith.addf %64, %68 : vector<8x32xf32>
    %c1_50 = arith.constant 1 : index
    %c0_51 = arith.constant 0 : index
    %c0_52 = arith.constant 0 : index
    %70 = vector.load %arg9[%c1_50, %c0_51, %c0_52] : memref<2x1x32xf32, #tpu.memory_space<vmem>>, vector<1x1x32xf32>
    %71 = vector.shape_cast %70 : vector<1x1x32xf32> to vector<1x32xf32>
    %72 = vector.broadcast %71 : vector<1x32xf32> to vector<8x32xf32>
    %73 = arith.addf %69, %72 : vector<8x32xf32>
    %cst_53 = arith.constant 0.000000e+00 : f32
    %74 = vector.broadcast %cst_53 : f32 to vector<8x32xf32>
    %75 = arith.maximumf %73, %74 : vector<8x32xf32>
    %76 = arith.truncf %75 : vector<8x32xf32> to vector<8x32xbf16>
    %c1_54 = arith.constant 1 : index
    %c0_55 = arith.constant 0 : index
    %c0_56 = arith.constant 0 : index
    %77 = vector.load %arg10[%c1_54, %c0_55, %c0_56] : memref<2x32x32xbf16, #tpu.memory_space<vmem>>, vector<1x32x32xbf16>
    %78 = vector.shape_cast %77 : vector<1x32x32xbf16> to vector<32x32xbf16>
    %cst_57 = arith.constant dense<0.000000e+00> : vector<8x32xf32>
    %79 = tpu.matmul %76, %78, %cst_57 {dimension_numbers = #tpu.dot_dimension_numbers<[1], [0], [0], [1], [0, 0, 1, 1], [], []>} : vector<8x32xbf16>, vector<32x32xbf16>, vector<8x32xf32> -> vector<8x32xf32>
    %c1_58 = arith.constant 1 : index
    %c0_59 = arith.constant 0 : index
    %c0_60 = arith.constant 0 : index
    %80 = vector.load %arg11[%c1_58, %c0_59, %c0_60] : memref<2x1x32xf32, #tpu.memory_space<vmem>>, vector<1x1x32xf32>
    %81 = vector.shape_cast %80 : vector<1x1x32xf32> to vector<1x32xf32>
    %82 = vector.broadcast %81 : vector<1x32xf32> to vector<8x32xf32>
    %83 = arith.addf %79, %82 : vector<8x32xf32>
    %cst_61 = arith.constant 0.000000e+00 : f32
    %84 = vector.broadcast %cst_61 : f32 to vector<8x32xf32>
    %85 = arith.maximumf %83, %84 : vector<8x32xf32>
    %86 = arith.truncf %85 : vector<8x32xf32> to vector<8x32xbf16>
    %c2 = arith.constant 2 : index
    %c0_62 = arith.constant 0 : index
    %c0_63 = arith.constant 0 : index
    %87 = vector.load %arg6[%c2, %c0_62, %c0_63] : memref<3x32x128xbf16, #tpu.memory_space<vmem>>, vector<1x32x128xbf16>
    %88 = vector.shape_cast %87 : vector<1x32x128xbf16> to vector<32x128xbf16>
    %cst_64 = arith.constant dense<0.000000e+00> : vector<8x128xf32>
    %89 = tpu.matmul %86, %88, %cst_64 {dimension_numbers = #tpu.dot_dimension_numbers<[1], [0], [0], [1], [0, 0, 1, 1], [], []>} : vector<8x32xbf16>, vector<32x128xbf16>, vector<8x128xf32> -> vector<8x128xf32>
    %90 = vector.extract_strided_slice %89 {offsets = [0, 64], sizes = [8, 64], strides = [1, 1]} : vector<8x128xf32> to vector<8x64xf32>
    %91 = arith.addf %54, %90 : vector<8x64xf32>
    %92 = vector.extract_strided_slice %91 {offsets = [0, 0], sizes = [8, 32], strides = [1, 1]} : vector<8x64xf32> to vector<8x32xf32>
    %c0_65 = arith.constant 0 : index
    %c0_66 = arith.constant 0 : index
    %93 = vector.load %arg12[%c0_65, %c0_66] : memref<1x32xf32, #tpu.memory_space<vmem>>, vector<1x32xf32>
    %94 = vector.broadcast %93 : vector<1x32xf32> to vector<8x32xf32>
    %95 = arith.addf %92, %94 : vector<8x32xf32>
    %96 = vector.extract_strided_slice %91 {offsets = [0, 32], sizes = [8, 32], strides = [1, 1]} : vector<8x64xf32> to vector<8x32xf32>
    %97 = arith.truncf %96 : vector<8x32xf32> to vector<8x32xbf16>
    %cst_67 = arith.constant dense<0.000000e+00> : vector<8x32xf32>
    %98 = tpu.matmul %5, %97, %cst_67 {dimension_numbers = #tpu.dot_dimension_numbers<[1], [0], [0], [1], [0, 0, 1, 1], [], []>} : vector<8x8xbf16>, vector<8x32xbf16>, vector<8x32xf32> -> vector<8x32xf32>
    %c0_68 = arith.constant 0 : index
    %c0_69 = arith.constant 0 : index
    %99 = vector.load %arg13[%c0_68, %c0_69] : memref<1x32xf32, #tpu.memory_space<vmem>>, vector<1x32xf32>
    %100 = vector.broadcast %99 : vector<1x32xf32> to vector<8x32xf32>
    %101 = arith.addf %98, %100 : vector<8x32xf32>
    %cst_70 = arith.constant 0.000000e+00 : f32
    %102 = vector.broadcast %cst_70 : f32 to vector<8x96xf32>
    %103 = tpu.concatenate %95, %102 in 1 : vector<8x32xf32>, vector<8x96xf32> -> vector<8x128xf32>
    %c0_71 = arith.constant 0 : index
    %c0_72 = arith.constant 0 : index
    %c0_73 = arith.constant 0 : index
    %104 = vector.load %arg14[%c0_71, %c0_72, %c0_73] : memref<1x8x128xf32, #tpu.memory_space<vmem>>, vector<1x8x128xf32>
    %105 = vector.shape_cast %104 : vector<1x8x128xf32> to vector<8x128xf32>
    %106 = vector.shape_cast %103 : vector<8x128xf32> to vector<1x8x128xf32>
    tpu.vector_store %arg14[%c0_71, %c0_72, %c0_73], %106 {strides = array<i32>} : memref<1x8x128xf32, #tpu.memory_space<vmem>>, vector<1x8x128xf32>,
    %cst_74 = arith.constant 0.000000e+00 : f32
    %107 = vector.broadcast %cst_74 : f32 to vector<8x96xf32>
    %108 = tpu.concatenate %101, %107 in 1 : vector<8x32xf32>, vector<8x96xf32> -> vector<8x128xf32>
    %c0_75 = arith.constant 0 : index
    %c0_76 = arith.constant 0 : index
    %c0_77 = arith.constant 0 : index
    %109 = vector.load %arg15[%c0_75, %c0_76, %c0_77] : memref<1x8x128xf32, #tpu.memory_space<vmem>>, vector<1x8x128xf32>
    %110 = vector.shape_cast %109 : vector<1x8x128xf32> to vector<8x128xf32>
    %111 = vector.shape_cast %108 : vector<8x128xf32> to vector<1x8x128xf32>
    tpu.vector_store %arg15[%c0_75, %c0_76, %c0_77], %111 {strides = array<i32>} : memref<1x8x128xf32, #tpu.memory_space<vmem>>, vector<1x8x128xf32>,
    return
  }
  func.func @transform_0(%arg0: i32) -> (i32, i32, i32) {
    %c0_i32 = arith.constant 0 : i32
    %c0_i32_0 = arith.constant 0 : i32
    %c0_i32_1 = arith.constant 0 : i32
    return %arg0, %c0_i32, %c0_i32_0 : i32, i32, i32
  }
  func.func @transform_1(%arg0: i32) -> (i32, i32, i32) {
    %c0_i32 = arith.constant 0 : i32
    %c0_i32_0 = arith.constant 0 : i32
    %c0_i32_1 = arith.constant 0 : i32
    return %arg0, %c0_i32, %c0_i32_0 : i32, i32, i32
  }
  func.func @transform_2(%arg0: i32) -> (i32, i32, i32) {
    %c0_i32 = arith.constant 0 : i32
    %c0_i32_0 = arith.constant 0 : i32
    %c0_i32_1 = arith.constant 0 : i32
    return %arg0, %c0_i32, %c0_i32_0 : i32, i32, i32
  }
  func.func @transform_3(%arg0: i32) -> (i32, i32) {
    %c0_i32 = arith.constant 0 : i32
    %c0_i32_0 = arith.constant 0 : i32
    %c0_i32_1 = arith.constant 0 : i32
    return %c0_i32, %c0_i32_0 : i32, i32
  }
  func.func @transform_4(%arg0: i32) -> (i32, i32) {
    %c0_i32 = arith.constant 0 : i32
    %c0_i32_0 = arith.constant 0 : i32
    %c0_i32_1 = arith.constant 0 : i32
    return %c0_i32, %c0_i32_0 : i32, i32
  }
  func.func @transform_5(%arg0: i32) -> (i32, i32, i32) {
    %c0_i32 = arith.constant 0 : i32
    %c0_i32_0 = arith.constant 0 : i32
    %c0_i32_1 = arith.constant 0 : i32
    %c0_i32_2 = arith.constant 0 : i32
    return %c0_i32, %c0_i32_0, %c0_i32_1 : i32, i32, i32
  }
  func.func @transform_6(%arg0: i32) -> (i32, i32, i32) {
    %c0_i32 = arith.constant 0 : i32
    %c0_i32_0 = arith.constant 0 : i32
    %c0_i32_1 = arith.constant 0 : i32
    %c0_i32_2 = arith.constant 0 : i32
    return %c0_i32, %c0_i32_0, %c0_i32_1 : i32, i32, i32
  }
  func.func @transform_7(%arg0: i32) -> (i32, i32, i32) {
    %c0_i32 = arith.constant 0 : i32
    %c0_i32_0 = arith.constant 0 : i32
    %c0_i32_1 = arith.constant 0 : i32
    %c0_i32_2 = arith.constant 0 : i32
    return %c0_i32, %c0_i32_0, %c0_i32_1 : i32, i32, i32
  }
  func.func @transform_8(%arg0: i32) -> (i32, i32, i32) {
    %c0_i32 = arith.constant 0 : i32
    %c0_i32_0 = arith.constant 0 : i32
    %c0_i32_1 = arith.constant 0 : i32
    %c0_i32_2 = arith.constant 0 : i32
    return %c0_i32, %c0_i32_0, %c0_i32_1 : i32, i32, i32
  }
  func.func @transform_9(%arg0: i32) -> (i32, i32, i32) {
    %c0_i32 = arith.constant 0 : i32
    %c0_i32_0 = arith.constant 0 : i32
    %c0_i32_1 = arith.constant 0 : i32
    %c0_i32_2 = arith.constant 0 : i32
    return %c0_i32, %c0_i32_0, %c0_i32_1 : i32, i32, i32
  }
  func.func @transform_10(%arg0: i32) -> (i32, i32, i32) {
    %c0_i32 = arith.constant 0 : i32
    %c0_i32_0 = arith.constant 0 : i32
    %c0_i32_1 = arith.constant 0 : i32
    %c0_i32_2 = arith.constant 0 : i32
    return %c0_i32, %c0_i32_0, %c0_i32_1 : i32, i32, i32
  }
  func.func @transform_11(%arg0: i32) -> (i32, i32) {
    %c0_i32 = arith.constant 0 : i32
    %c0_i32_0 = arith.constant 0 : i32
    %c0_i32_1 = arith.constant 0 : i32
    return %c0_i32, %c0_i32_0 : i32, i32
  }
  func.func @transform_12(%arg0: i32) -> (i32, i32) {
    %c0_i32 = arith.constant 0 : i32
    %c0_i32_0 = arith.constant 0 : i32
    %c0_i32_1 = arith.constant 0 : i32
    return %c0_i32, %c0_i32_0 : i32, i32
  }
  func.func @transform_13(%arg0: i32) -> (i32, i32, i32) {
    %c0_i32 = arith.constant 0 : i32
    %c0_i32_0 = arith.constant 0 : i32
    %c0_i32_1 = arith.constant 0 : i32
    return %arg0, %c0_i32, %c0_i32_0 : i32, i32, i32
  }
  func.func @transform_14(%arg0: i32) -> (i32, i32, i32) {
    %c0_i32 = arith.constant 0 : i32
    %c0_i32_0 = arith.constant 0 : i32
    %c0_i32_1 = arith.constant 0 : i32
    return %arg0, %c0_i32, %c0_i32_0 : i32, i32, i32
  }
}

</mosaic_0001>

<llo_original>
// kernel: tpu_custom_call.1
$region0: #{tpu_custom_call.1}
  #allocation0 [shape = 'u32[]', space=smem, size = 0x4, offset = 0x4, fixed_abs, tag = 'smem constant byte address 0x4 - core index']
  #allocation1 [shape = 'u32[144,128]{1,0:T(1,128)}', space=vmem, size = 0x12000, scoped, tag = 'internal scratch']
  %s0 = inlined_call_operand.vmem [shape: f32[2,8,4], index: 0, kind: input, shape index: {}]
  %s1 = inlined_call_operand.vmem [shape: bf16[2,8,8], index: 1, kind: input, shape index: {}]
  %s2 = inlined_call_operand.vmem [shape: bf16[2,8,8], index: 2, kind: input, shape index: {}]
  %s3 = inlined_call_operand.hbm [shape: f32[4,32], index: 3, kind: input, shape index: {}]
  %s4 = inlined_call_operand.hbm [shape: f32[1,32], index: 4, kind: input, shape index: {}]
  %s5 = inlined_call_operand.hbm [shape: bf16[3,32,128], index: 5, kind: input, shape index: {}]
  %s6 = inlined_call_operand.vmem [shape: f32[2,1,32], index: 6, kind: input, shape index: {}]
  %s7 = inlined_call_operand.vmem [shape: bf16[2,32,32], index: 7, kind: input, shape index: {}]
  %s8 = inlined_call_operand.vmem [shape: f32[2,1,32], index: 8, kind: input, shape index: {}]
  %s9 = inlined_call_operand.hbm [shape: bf16[2,32,32], index: 9, kind: input, shape index: {}]
  %s10 = inlined_call_operand.vmem [shape: f32[2,1,32], index: 10, kind: input, shape index: {}]
  %s11 = inlined_call_operand.vmem [shape: f32[1,32], index: 11, kind: input, shape index: {}]
  %s12 = inlined_call_operand.vmem [shape: f32[1,32], index: 12, kind: input, shape index: {}]
  %s13 = inlined_call_operand.hbm [shape: f32[2,8,128], index: 13, kind: output, shape index: {0}]
  %s14 = inlined_call_operand.hbm [shape: f32[2,8,128], index: 14, kind: output, shape index: {1}]
  %15 = xla_tuple %s13, %s14
  %s16 = sld [smem:[#allocation0]]
  $region109: #{tpu_custom_call.1} parent=0
    _
  %s18 = ssub.s32 1, %s16
  %s19 = scalar_select 0, %s18, %s16
  $region1: #{tpu_custom_call.1} parent=0
    #allocation2 [shape = 'u8[2048]{0}', space=vmem, size = 0x800, scoped, tag = 'input window, operand 3, single buffered']
    #allocation3 [shape = 's32[2]{0}', space=sflag, size = 0x8, scoped, tag = 'scoped memory for tpu_custom_call.1']
    #allocation4 [shape = 's32[2]{0}', space=sflag, size = 0x8, scoped, tag = 'scoped memory for tpu_custom_call.1']
    #allocation5 [shape = 'u8[512]{0}', space=vmem, size = 0x400, scoped, tag = 'input window, operand 4, single buffered']
    #allocation6 [shape = 's32[1]{0}', space=sflag, size = 0x4, scoped, tag = 'scoped memory for tpu_custom_call.1']
    #allocation7 [shape = 'u8[24576]{0}', space=vmem, size = 0x6000, scoped, tag = 'input window, operand 5, single buffered']
    #allocation8 [shape = 'u8[16384]{0}', space=vmem, size = 0x4000, scoped, tag = 'input window, operand 9, single buffered']
    #allocation9 [shape = 's32[1]{0}', space=sflag, size = 0x4, scoped, tag = 'scoped memory for tpu_custom_call.1']
    #allocation10 [shape = 'u8[8192]{0}', space=vmem, size = 0x2000, scoped, tag = 'output window, operand 0']
    #allocation11 [shape = 'u8[8192]{0}', space=vmem, size = 0x2000, scoped, tag = 'output window, operand 1']
    #allocation12 [shape = 's32[2]{0}', space=sflag, size = 0x8, scoped, tag = 'scoped memory for tpu_custom_call.1']
    %20 = vsyncpa [#allocation3], 0
    %21 = vsyncpa [#allocation6], 0
    %22 = vsyncpa [#allocation9], 0
    %23 = vsyncpa [#allocation4], 0
    %s24 = scalar_lea.sflag [#allocation4], 1
    %25 = vsyncpa %s24, 0
    %26 = vsyncpa [#allocation12], 0
    %s27 = scalar_lea.sflag [#allocation12], 1
    %28 = vsyncpa %s27, 0
    loop: start=0, step=1, limit=4
    $region2: #{tpu_custom_call.1} parent=1 // loop_pre_header
      _
    $region3: #{tpu_custom_call.1} parent=1 // loop_header
      %s30 = sphi 0, %s34
      %p31 = scmp.ge.s32.totalorder %s30, 4
      %s40 = sphi 0, %s42
      %s43 = sphi 0, %s40
      %s44 = sphi 0, %s43
      %s60 = sphi 0, %s44
      %s66 = sphi 0, %s68
      %s69 = sphi 0, %s66
      %s70 = sphi 0, %s69
      %s86 = sphi 0, %s70
      %s92 = sphi 0, %s94
      %s95 = sphi 0, %s92
      %s96 = sphi 0, %s95
      %s112 = sphi 0, %s96
      %s116 = sphi 0, %s116
      %s118 = sphi 0, %s116
      %s119 = sphi 0, %s118
      %s133 = sphi 0, %s119
      %s137 = sphi 0, %s137
      %s139 = sphi 0, %s137
      %s140 = sphi 0, %s139
      %s154 = sphi 0, %s140
      %s158 = sphi 0, %s158
      %s160 = sphi 0, %s158
      %s161 = sphi 0, %s160
      %s175 = sphi 0, %s161
      %s179 = sphi 0, %s179
      %s181 = sphi 0, %s179
      %s182 = sphi 0, %s181
      %s196 = sphi 0, %s182
      %s200 = sphi 0, %s200
      %s202 = sphi 0, %s200
      %s203 = sphi 0, %s202
      %s217 = sphi 0, %s203
      %s221 = sphi 0, %s221
      %s223 = sphi 0, %s221
      %s224 = sphi 0, %s223
      %s238 = sphi 0, %s224
      %s242 = sphi 0, %s242
      %s244 = sphi 0, %s242
      %s245 = sphi 0, %s244
      %s259 = sphi 0, %s245
      %s263 = sphi 0, %s263
      %s265 = sphi 0, %s263
      %s266 = sphi 0, %s265
      %s280 = sphi 0, %s266
      %s284 = sphi 0, %s284
      %s286 = sphi 0, %s284
      %s287 = sphi 0, %s286
      %s301 = sphi 0, %s287
      %s305 = sphi 0, %s305
      %s307 = sphi 0, %s305
      %s308 = sphi 0, %s307
      %s322 = sphi 0, %s308
      %s328 = sphi 0, %s330
      %s331 = sphi 0, %s328
      %s332 = sphi 0, %s331
      %s348 = sphi 0, %s332
      %s354 = sphi 0, %s356
      %s357 = sphi 0, %s354
      %s358 = sphi 0, %s357
      %s374 = sphi 0, %s358
    $region4: #{tpu_custom_call.1} parent=1 // loop_header_branch
      %33 = sbr.rel (%p31) target = $region8
    $region5: #{tpu_custom_call.1} parent=1 // loop_body
      %s35 = ssub.s32 %s30, 1
      %s36 = ssub.s32 %s30, 2
      %s37 = sadd.s32 %s30, 1
      %s38 = ssub.s32 %s30, %s37
      %p39 = scmp.eq.s32.totalorder %s38, 0
      %s41 = sadd.s32 %s40, 1
      %s42 = scalar_select %p39, %s40, %s41
      %p45 = pneg %p39
      %p46 = scmp.eq.s32.totalorder %s30, 1
      %p47 = por %p45, %p46
      %p48 = scmp.ne.s32.totalorder %s40, %s43
      %p49 = scmp.eq.s32.totalorder %s30, 0
      %p50 = por %p48, %p49
      %p51 = scmp.ne.s32.totalorder %s40, %s43
      %p52 = scmp.eq.s32.totalorder %s35, 1
      %p53 = por %p51, %p52
      %p54 = scmp.ne.s32.totalorder %s43, %s44
      %p55 = scmp.eq.s32.totalorder %s35, 0
      %p56 = por %p54, %p55
      %p57 = scmp.ne.s32.totalorder %s43, %s44
      %p58 = scmp.eq.s32.totalorder %s36, 1
      %p59 = por %p57, %p58
      %p61 = scmp.ne.s32.totalorder %s44, %s60
      %p62 = scmp.eq.s32.totalorder %s36, 0
      %p63 = por %p61, %p62
      %s64 = ssub.s32 %s30, %s37
      %p65 = scmp.eq.s32.totalorder %s64, 0
      %s67 = sadd.s32 %s66, 1
      %s68 = scalar_select %p65, %s66, %s67
      %p71 = pneg %p65
      %p72 = scmp.eq.s32.totalorder %s30, 1
      %p73 = por %p71, %p72
      %p74 = scmp.ne.s32.totalorder %s66, %s69
      %p75 = scmp.eq.s32.totalorder %s30, 0
      %p76 = por %p74, %p75
      %p77 = scmp.ne.s32.totalorder %s66, %s69
      %p78 = scmp.eq.s32.totalorder %s35, 1
      %p79 = por %p77, %p78
      %p80 = scmp.ne.s32.totalorder %s69, %s70
      %p81 = scmp.eq.s32.totalorder %s35, 0
      %p82 = por %p80, %p81
      %p83 = scmp.ne.s32.totalorder %s69, %s70
      %p84 = scmp.eq.s32.totalorder %s36, 1
      %p85 = por %p83, %p84
      %p87 = scmp.ne.s32.totalorder %s70, %s86
      %p88 = scmp.eq.s32.totalorder %s36, 0
      %p89 = por %p87, %p88
      %s90 = ssub.s32 %s30, %s37
      %p91 = scmp.eq.s32.totalorder %s90, 0
      %s93 = sadd.s32 %s92, 1
      %s94 = scalar_select %p91, %s92, %s93
      %p97 = pneg %p91
      %p98 = scmp.eq.s32.totalorder %s30, 1
      %p99 = por %p97, %p98
      %p100 = scmp.ne.s32.totalorder %s92, %s95
      %p101 = scmp.eq.s32.totalorder %s30, 0
      %p102 = por %p100, %p101
      %p103 = scmp.ne.s32.totalorder %s92, %s95
      %p104 = scmp.eq.s32.totalorder %s35, 1
      %p105 = por %p103, %p104
      %p106 = scmp.ne.s32.totalorder %s95, %s96
      %p107 = scmp.eq.s32.totalorder %s35, 0
      %p108 = por %p106, %p107
      %p109 = scmp.ne.s32.totalorder %s95, %s96
      %p110 = scmp.eq.s32.totalorder %s36, 1
      %p111 = por %p109, %p110
      %p113 = scmp.ne.s32.totalorder %s96, %s112
      %p114 = scmp.eq.s32.totalorder %s36, 0
      %p115 = por %p113, %p114
      %s117 = sadd.s32 %s116, 1
      %p120 = scmp.eq.s32.totalorder %s30, 1
      %p121 = scmp.ne.s32.totalorder %s116, %s118
      %p122 = scmp.eq.s32.totalorder %s30, 0
      %p123 = por %p121, %p122
      %p124 = scmp.ne.s32.totalorder %s116, %s118
      %p125 = scmp.eq.s32.totalorder %s35, 1
      %p126 = por %p124, %p125
      %p127 = scmp.ne.s32.totalorder %s118, %s119
      %p128 = scmp.eq.s32.totalorder %s35, 0
      %p129 = por %p127, %p128
      %p130 = scmp.ne.s32.totalorder %s118, %s119
      %p131 = scmp.eq.s32.totalorder %s36, 1
      %p132 = por %p130, %p131
      %p134 = scmp.ne.s32.totalorder %s119, %s133
      %p135 = scmp.eq.s32.totalorder %s36, 0
      %p136 = por %p134, %p135
      %s138 = sadd.s32 %s137, 1
      %p141 = scmp.eq.s32.totalorder %s30, 1
      %p142 = scmp.ne.s32.totalorder %s137, %s139
      %p143 = scmp.eq.s32.totalorder %s30, 0
      %p144 = por %p142, %p143
      %p145 = scmp.ne.s32.totalorder %s137, %s139
      %p146 = scmp.eq.s32.totalorder %s35, 1
      %p147 = por %p145, %p146
      %p148 = scmp.ne.s32.totalorder %s139, %s140
      %p149 = scmp.eq.s32.totalorder %s35, 0
      %p150 = por %p148, %p149
      %p151 = scmp.ne.s32.totalorder %s139, %s140
      %p152 = scmp.eq.s32.totalorder %s36, 1
      %p153 = por %p151, %p152
      %p155 = scmp.ne.s32.totalorder %s140, %s154
      %p156 = scmp.eq.s32.totalorder %s36, 0
      %p157 = por %p155, %p156
      %s159 = sadd.s32 %s158, 1
      %p162 = scmp.eq.s32.totalorder %s30, 1
      %p163 = scmp.ne.s32.totalorder %s158, %s160
      %p164 = scmp.eq.s32.totalorder %s30, 0
      %p165 = por %p163, %p164
      %p166 = scmp.ne.s32.totalorder %s158, %s160
      %p167 = scmp.eq.s32.totalorder %s35, 1
      %p168 = por %p166, %p167
      %p169 = scmp.ne.s32.totalorder %s160, %s161
      %p170 = scmp.eq.s32.totalorder %s35, 0
      %p171 = por %p169, %p170
      %p172 = scmp.ne.s32.totalorder %s160, %s161
      %p173 = scmp.eq.s32.totalorder %s36, 1
      %p174 = por %p172, %p173
      %p176 = scmp.ne.s32.totalorder %s161, %s175
      %p177 = scmp.eq.s32.totalorder %s36, 0
      %p178 = por %p176, %p177
      %s180 = sadd.s32 %s179, 1
      %p183 = scmp.eq.s32.totalorder %s30, 1
      %p184 = scmp.ne.s32.totalorder %s179, %s181
      %p185 = scmp.eq.s32.totalorder %s30, 0
      %p186 = por %p184, %p185
      %p187 = scmp.ne.s32.totalorder %s179, %s181
      %p188 = scmp.eq.s32.totalorder %s35, 1
      %p189 = por %p187, %p188
      %p190 = scmp.ne.s32.totalorder %s181, %s182
      %p191 = scmp.eq.s32.totalorder %s35, 0
      %p192 = por %p190, %p191
      %p193 = scmp.ne.s32.totalorder %s181, %s182
      %p194 = scmp.eq.s32.totalorder %s36, 1
      %p195 = por %p193, %p194
      %p197 = scmp.ne.s32.totalorder %s182, %s196
      %p198 = scmp.eq.s32.totalorder %s36, 0
      %p199 = por %p197, %p198
      %s201 = sadd.s32 %s200, 1
      %p204 = scmp.eq.s32.totalorder %s30, 1
      %p205 = scmp.ne.s32.totalorder %s200, %s202
      %p206 = scmp.eq.s32.totalorder %s30, 0
      %p207 = por %p205, %p206
      %p208 = scmp.ne.s32.totalorder %s200, %s202
      %p209 = scmp.eq.s32.totalorder %s35, 1
      %p210 = por %p208, %p209
      %p211 = scmp.ne.s32.totalorder %s202, %s203
      %p212 = scmp.eq.s32.totalorder %s35, 0
      %p213 = por %p211, %p212
      %p214 = scmp.ne.s32.totalorder %s202, %s203
      %p215 = scmp.eq.s32.totalorder %s36, 1
      %p216 = por %p214, %p215
      %p218 = scmp.ne.s32.totalorder %s203, %s217
      %p219 = scmp.eq.s32.totalorder %s36, 0
      %p220 = por %p218, %p219
      %s222 = sadd.s32 %s221, 1
      %p225 = scmp.eq.s32.totalorder %s30, 1
      %p226 = scmp.ne.s32.totalorder %s221, %s223
      %p227 = scmp.eq.s32.totalorder %s30, 0
      %p228 = por %p226, %p227
      %p229 = scmp.ne.s32.totalorder %s221, %s223
      %p230 = scmp.eq.s32.totalorder %s35, 1
      %p231 = por %p229, %p230
      %p232 = scmp.ne.s32.totalorder %s223, %s224
      %p233 = scmp.eq.s32.totalorder %s35, 0
      %p234 = por %p232, %p233
      %p235 = scmp.ne.s32.totalorder %s223, %s224
      %p236 = scmp.eq.s32.totalorder %s36, 1
      %p237 = por %p235, %p236
      %p239 = scmp.ne.s32.totalorder %s224, %s238
      %p240 = scmp.eq.s32.totalorder %s36, 0
      %p241 = por %p239, %p240
      %s243 = sadd.s32 %s242, 1
      %p246 = scmp.eq.s32.totalorder %s30, 1
      %p247 = scmp.ne.s32.totalorder %s242, %s244
      %p248 = scmp.eq.s32.totalorder %s30, 0
      %p249 = por %p247, %p248
      %p250 = scmp.ne.s32.totalorder %s242, %s244
      %p251 = scmp.eq.s32.totalorder %s35, 1
      %p252 = por %p250, %p251
      %p253 = scmp.ne.s32.totalorder %s244, %s245
      %p254 = scmp.eq.s32.totalorder %s35, 0
      %p255 = por %p253, %p254
      %p256 = scmp.ne.s32.totalorder %s244, %s245
      %p257 = scmp.eq.s32.totalorder %s36, 1
      %p258 = por %p256, %p257
      %p260 = scmp.ne.s32.totalorder %s245, %s259
      %p261 = scmp.eq.s32.totalorder %s36, 0
      %p262 = por %p260, %p261
      %s264 = sadd.s32 %s263, 1
      %p267 = scmp.eq.s32.totalorder %s30, 1
      %p268 = scmp.ne.s32.totalorder %s263, %s265
      %p269 = scmp.eq.s32.totalorder %s30, 0
      %p270 = por %p268, %p269
      %p271 = scmp.ne.s32.totalorder %s263, %s265
      %p272 = scmp.eq.s32.totalorder %s35, 1
      %p273 = por %p271, %p272
      %p274 = scmp.ne.s32.totalorder %s265, %s266
      %p275 = scmp.eq.s32.totalorder %s35, 0
      %p276 = por %p274, %p275
      %p277 = scmp.ne.s32.totalorder %s265, %s266
      %p278 = scmp.eq.s32.totalorder %s36, 1
      %p279 = por %p277, %p278
      %p281 = scmp.ne.s32.totalorder %s266, %s280
      %p282 = scmp.eq.s32.totalorder %s36, 0
      %p283 = por %p281, %p282
      %s285 = sadd.s32 %s284, 1
      %p288 = scmp.eq.s32.totalorder %s30, 1
      %p289 = scmp.ne.s32.totalorder %s284, %s286
      %p290 = scmp.eq.s32.totalorder %s30, 0
      %p291 = por %p289, %p290
      %p292 = scmp.ne.s32.totalorder %s284, %s286
      %p293 = scmp.eq.s32.totalorder %s35, 1
      %p294 = por %p292, %p293
      %p295 = scmp.ne.s32.totalorder %s286, %s287
      %p296 = scmp.eq.s32.totalorder %s35, 0
      %p297 = por %p295, %p296
      %p298 = scmp.ne.s32.totalorder %s286, %s287
      %p299 = scmp.eq.s32.totalorder %s36, 1
      %p300 = por %p298, %p299
      %p302 = scmp.ne.s32.totalorder %s287, %s301
      %p303 = scmp.eq.s32.totalorder %s36, 0
      %p304 = por %p302, %p303
      %s306 = sadd.s32 %s305, 1
      %p309 = scmp.eq.s32.totalorder %s30, 1
      %p310 = scmp.ne.s32.totalorder %s305, %s307
      %p311 = scmp.eq.s32.totalorder %s30, 0
      %p312 = por %p310, %p311
      %p313 = scmp.ne.s32.totalorder %s305, %s307
      %p314 = scmp.eq.s32.totalorder %s35, 1
      %p315 = por %p313, %p314
      %p316 = scmp.ne.s32.totalorder %s307, %s308
      %p317 = scmp.eq.s32.totalorder %s35, 0
      %p318 = por %p316, %p317
      %p319 = scmp.ne.s32.totalorder %s307, %s308
      %p320 = scmp.eq.s32.totalorder %s36, 1
      %p321 = por %p319, %p320
      %p323 = scmp.ne.s32.totalorder %s308, %s322
      %p324 = scmp.eq.s32.totalorder %s36, 0
      %p325 = por %p323, %p324
      %s326 = ssub.s32 %s30, %s37
      %p327 = scmp.eq.s32.totalorder %s326, 0
      %s329 = sadd.s32 %s328, 1
      %s330 = scalar_select %p327, %s328, %s329
      %p333 = pneg %p327
      %p334 = scmp.eq.s32.totalorder %s30, 1
      %p335 = por %p333, %p334
      %p336 = scmp.ne.s32.totalorder %s328, %s331
      %p337 = scmp.eq.s32.totalorder %s30, 0
      %p338 = por %p336, %p337
      %p339 = scmp.ne.s32.totalorder %s328, %s331
      %p340 = scmp.eq.s32.totalorder %s35, 1
      %p341 = por %p339, %p340
      %p342 = scmp.ne.s32.totalorder %s331, %s332
      %p343 = scmp.eq.s32.totalorder %s35, 0
      %p344 = por %p342, %p343
      %p345 = scmp.ne.s32.totalorder %s331, %s332
      %p346 = scmp.eq.s32.totalorder %s36, 1
      %p347 = por %p345, %p346
      %p349 = scmp.ne.s32.totalorder %s332, %s348
      %p350 = scmp.eq.s32.totalorder %s36, 0
      %p351 = por %p349, %p350
      %s352 = ssub.s32 %s30, %s37
      %p353 = scmp.eq.s32.totalorder %s352, 0
      %s355 = sadd.s32 %s354, 1
      %s356 = scalar_select %p353, %s354, %s355
      %p359 = pneg %p353
      %p360 = scmp.eq.s32.totalorder %s30, 1
      %p361 = por %p359, %p360
      %p362 = scmp.ne.s32.totalorder %s354, %s357
      %p363 = scmp.eq.s32.totalorder %s30, 0
      %p364 = por %p362, %p363
      %p365 = scmp.ne.s32.totalorder %s354, %s357
      %p366 = scmp.eq.s32.totalorder %s35, 1
      %p367 = por %p365, %p366
      %p368 = scmp.ne.s32.totalorder %s357, %s358
      %p369 = scmp.eq.s32.totalorder %s35, 0
      %p370 = por %p368, %p369
      %p371 = scmp.ne.s32.totalorder %s357, %s358
      %p372 = scmp.eq.s32.totalorder %s36, 1
      %p373 = por %p371, %p372
      %p375 = scmp.ne.s32.totalorder %s358, %s374
      %p376 = scmp.eq.s32.totalorder %s36, 0
      %p377 = por %p375, %p376
      %p378 = scmp.le.s32.totalorder 1, %s30
      %p379 = scmp.lt.s32.totalorder %s30, 3
      %p380 = pnand %p378, %p379
      %p381 = pneg %p380
      // Predicated region
      $region9: #{tpu_custom_call.1} parent=5 // pred_check
        _
      $region10: #{tpu_custom_call.1} parent=5 // pred_check_branch
        %383 = sbr.rel (%p380) target = $region12
      $region11: #{tpu_custom_call.1} parent=5 // pred_region
        %s384 = ssub.s32 %s30, 1
        // Predicated region
        $region13: #{tpu_custom_call.1} parent=11 // pred_check
          %p385 = pneg %p129
        $region14: #{tpu_custom_call.1} parent=11 // pred_check_branch
          %387 = sbr.rel (%p385) target = $region16
        $region15: #{tpu_custom_call.1} parent=11 // pred_region
          %s389 = ssub.s32 64, 64
          %390 = vsyncadd [#allocation3], %s389
          %s392 = sshll.u32 [#allocation2], 4
          %s393 = int_to_ptr.vmem [resolvable:$true] %s392
          %395 = dma.hbm_to_vmem [thread:$0]  %s3, 64, %s393, [#allocation3]
        $region16: #{tpu_custom_call.1} parent=11 // pred_fallthru
          _
        // Predicated region
        $region17: #{tpu_custom_call.1} parent=11 // pred_check
          %p396 = pneg %p150
        $region18: #{tpu_custom_call.1} parent=11 // pred_check_branch
          %398 = sbr.rel (%p396) target = $region20
        $region19: #{tpu_custom_call.1} parent=11 // pred_region
          %s400 = ssub.s32 16, 16
          %401 = vsyncadd [#allocation6], %s400
          %s403 = sshll.u32 [#allocation5], 4
          %s404 = int_to_ptr.vmem [resolvable:$true] %s403
          %406 = dma.hbm_to_vmem [thread:$0]  %s4, 16, %s404, [#allocation6]
        $region20: #{tpu_custom_call.1} parent=11 // pred_fallthru
          _
        // Predicated region
        $region21: #{tpu_custom_call.1} parent=11 // pred_check
          %p407 = pneg %p171
        $region22: #{tpu_custom_call.1} parent=11 // pred_check_branch
          %409 = sbr.rel (%p407) target = $region24
        $region23: #{tpu_custom_call.1} parent=11 // pred_region
          %s411 = ssub.s32 768, 768
          %412 = vsyncadd [#allocation6], %s411
          %s413 = sshll.u32 [#allocation7], 4
          %s414 = int_to_ptr.vmem [resolvable:$true] %s413
          %419 = dma.hbm_to_vmem [thread:$0]  %s5, 768, %s414, [#allocation6], 64, 64, 4
        $region24: #{tpu_custom_call.1} parent=11 // pred_fallthru
          _
        // Predicated region
        $region25: #{tpu_custom_call.1} parent=11 // pred_check
          %p420 = pneg %p192
        $region26: #{tpu_custom_call.1} parent=11 // pred_check_branch
          %422 = sbr.rel (%p420) target = $region28
        $region27: #{tpu_custom_call.1} parent=11 // pred_region
          _
        $region28: #{tpu_custom_call.1} parent=11 // pred_fallthru
          _
        // Predicated region
        $region29: #{tpu_custom_call.1} parent=11 // pred_check
          %p423 = pneg %p213
        $region30: #{tpu_custom_call.1} parent=11 // pred_check_branch
          %425 = sbr.rel (%p423) target = $region32
        $region31: #{tpu_custom_call.1} parent=11 // pred_region
          _
        $region32: #{tpu_custom_call.1} parent=11 // pred_fallthru
          _
        // Predicated region
        $region33: #{tpu_custom_call.1} parent=11 // pred_check
          %p426 = pneg %p234
        $region34: #{tpu_custom_call.1} parent=11 // pred_check_branch
          %428 = sbr.rel (%p426) target = $region36
        $region35: #{tpu_custom_call.1} parent=11 // pred_region
          _
        $region36: #{tpu_custom_call.1} parent=11 // pred_fallthru
          _
        // Predicated region
        $region37: #{tpu_custom_call.1} parent=11 // pred_check
          %p429 = pneg %p255
        $region38: #{tpu_custom_call.1} parent=11 // pred_check_branch
          %431 = sbr.rel (%p429) target = $region40
        $region39: #{tpu_custom_call.1} parent=11 // pred_region
          %s433 = ssub.s32 512, 512
          %434 = vsyncadd [#allocation9], %s433
          %s435 = sshll.u32 [#allocation8], 4
          %s436 = int_to_ptr.vmem [resolvable:$true] %s435
          %441 = dma.hbm_to_vmem [thread:$0]  %s9, 512, %s436, [#allocation9], 64, 64, 4
        $region40: #{tpu_custom_call.1} parent=11 // pred_fallthru
          _
        // Predicated region
        $region41: #{tpu_custom_call.1} parent=11 // pred_check
          %p442 = pneg %p276
        $region42: #{tpu_custom_call.1} parent=11 // pred_check_branch
          %444 = sbr.rel (%p442) target = $region44
        $region43: #{tpu_custom_call.1} parent=11 // pred_region
          _
        $region44: #{tpu_custom_call.1} parent=11 // pred_fallthru
          _
        // Predicated region
        $region45: #{tpu_custom_call.1} parent=11 // pred_check
          %p445 = pneg %p297
        $region46: #{tpu_custom_call.1} parent=11 // pred_check_branch
          %447 = sbr.rel (%p445) target = $region48
        $region47: #{tpu_custom_call.1} parent=11 // pred_region
          _
        $region48: #{tpu_custom_call.1} parent=11 // pred_fallthru
          _
        // Predicated region
        $region49: #{tpu_custom_call.1} parent=11 // pred_check
          %p448 = pneg %p318
        $region50: #{tpu_custom_call.1} parent=11 // pred_check_branch
          %450 = sbr.rel (%p448) target = $region52
        $region51: #{tpu_custom_call.1} parent=11 // pred_region
          _
        $region52: #{tpu_custom_call.1} parent=11 // pred_fallthru
          _
      $region12: #{tpu_custom_call.1} parent=5 // pred_fallthru
        _
      %p451 = scmp.lt.s32.totalorder %s30, 2
      // Predicated region
      $region53: #{tpu_custom_call.1} parent=5 // pred_check
        %p452 = pneg %p451
      $region54: #{tpu_custom_call.1} parent=5 // pred_check_branch
        %454 = sbr.rel (%p452) target = $region56
      $region55: #{tpu_custom_call.1} parent=5 // pred_region
        // Predicated region
        $region57: #{tpu_custom_call.1} parent=55 // pred_check
          %p455 = pneg %p50
        $region58: #{tpu_custom_call.1} parent=55 // pred_check_branch
          %457 = sbr.rel (%p455) target = $region60
        $region59: #{tpu_custom_call.1} parent=55 // pred_region
          %p458 = scmp.lt.s32.totalorder %s30, 1
          %s459 = scalar_select %p458, %s30, 1
          %s460 = smul.addr %s459, 8
          %s461 = scalar_lea.vmem %s0, %s460
        $region60: #{tpu_custom_call.1} parent=55 // pred_fallthru
          _
        // Predicated region
        $region61: #{tpu_custom_call.1} parent=55 // pred_check
          %p462 = pneg %p76
        $region62: #{tpu_custom_call.1} parent=55 // pred_check_branch
          %464 = sbr.rel (%p462) target = $region64
        $region63: #{tpu_custom_call.1} parent=55 // pred_region
          %p465 = scmp.lt.s32.totalorder %s30, 1
          %s466 = scalar_select %p465, %s30, 1
          %s467 = smul.addr %s466, 4
          %s468 = scalar_lea.vmem %s1, %s467
        $region64: #{tpu_custom_call.1} parent=55 // pred_fallthru
          _
        // Predicated region
        $region65: #{tpu_custom_call.1} parent=55 // pred_check
          %p469 = pneg %p102
        $region66: #{tpu_custom_call.1} parent=55 // pred_check_branch
          %471 = sbr.rel (%p469) target = $region68
        $region67: #{tpu_custom_call.1} parent=55 // pred_region
          %p472 = scmp.lt.s32.totalorder %s30, 1
          %s473 = scalar_select %p472, %s30, 1
          %s474 = smul.addr %s473, 4
          %s475 = scalar_lea.vmem %s2, %s474
        $region68: #{tpu_custom_call.1} parent=55 // pred_fallthru
          _
      $region56: #{tpu_custom_call.1} parent=5 // pred_fallthru
        _
      %p476 = scmp.le.s32.totalorder 1, %s30
      %p477 = scmp.lt.s32.totalorder %s30, 3
      %p478 = pnand %p476, %p477
      %p479 = pneg %p478
      // Predicated region
      $region69: #{tpu_custom_call.1} parent=5 // pred_check
        _
      $region70: #{tpu_custom_call.1} parent=5 // pred_check_branch
        %481 = sbr.rel (%p478) target = $region72
      $region71: #{tpu_custom_call.1} parent=5 // pred_region
        %s482 = ssub.s32 %s30, 1
        // Predicated region
        $region73: #{tpu_custom_call.1} parent=71 // pred_check
          %p483 = pneg %p129
        $region74: #{tpu_custom_call.1} parent=71 // pred_check_branch
          %485 = sbr.rel (%p483) target = $region76
        $region75: #{tpu_custom_call.1} parent=71 // pred_region
          %486 = dma.done [#allocation3], 64
        $region76: #{tpu_custom_call.1} parent=71 // pred_fallthru
          _
        // Predicated region
        $region77: #{tpu_custom_call.1} parent=71 // pred_check
          %p487 = pneg %p150
        $region78: #{tpu_custom_call.1} parent=71 // pred_check_branch
          %489 = sbr.rel (%p487) target = $region80
        $region79: #{tpu_custom_call.1} parent=71 // pred_region
          %490 = dma.done [#allocation6], 16
        $region80: #{tpu_custom_call.1} parent=71 // pred_fallthru
          _
        // Predicated region
        $region81: #{tpu_custom_call.1} parent=71 // pred_check
          %p491 = pneg %p171
        $region82: #{tpu_custom_call.1} parent=71 // pred_check_branch
          %493 = sbr.rel (%p491) target = $region84
        $region83: #{tpu_custom_call.1} parent=71 // pred_region
          %494 = dma.done [#allocation6], 768
        $region84: #{tpu_custom_call.1} parent=71 // pred_fallthru
          _
        // Predicated region
        $region85: #{tpu_custom_call.1} parent=71 // pred_check
          %p495 = pneg %p255
        $region86: #{tpu_custom_call.1} parent=71 // pred_check_branch
          %497 = sbr.rel (%p495) target = $region88
        $region87: #{tpu_custom_call.1} parent=71 // pred_region
          %498 = dma.done [#allocation9], 512
        $region88: #{tpu_custom_call.1} parent=71 // pred_fallthru
          _
        %p499 = scmp.lt.s32.totalorder %s35, 1
        %s500 = scalar_select %p499, %s35, 1
        %s501 = smul.addr %s500, 8
        %s502 = scalar_lea.vmem %s0, %s501
        %p503 = pneg %p56
        %p504 = pneg %p53
        %p505 = scmp.lt.s32.totalorder %s35, 1
        %s506 = scalar_select %p505, %s35, 1
        %s507 = smul.addr %s506, 4
        %s508 = scalar_lea.vmem %s1, %s507
        %p509 = pneg %p82
        %p510 = pneg %p79
        %p511 = scmp.lt.s32.totalorder %s35, 1
        %s512 = scalar_select %p511, %s35, 1
        %s513 = smul.addr %s512, 4
        %s514 = scalar_lea.vmem %s2, %s513
        %p515 = pneg %p108
        %p516 = pneg %p105
        %p517 = pneg %p129
        %p518 = pneg %p126
        %p519 = pneg %p150
        %p520 = pneg %p147
        %p521 = pneg %p171
        %p522 = pneg %p168
        %p523 = pneg %p192
        %p524 = pneg %p189
        %p525 = pneg %p213
        %p526 = pneg %p210
        %p527 = pneg %p234
        %p528 = pneg %p231
        %p529 = pneg %p255
        %p530 = pneg %p252
        %p531 = pneg %p276
        %p532 = pneg %p273
        %p533 = pneg %p297
        %p534 = pneg %p294
        %p535 = pneg %p318
        %p536 = pneg %p315
        %p537 = pneg %p344
        %p538 = pneg %p341
        %s539 = sand.u32 %s331, 1
        %s540 = scalar_lea.sflag [#allocation4], %s539
        %s541 = sand.u32 %s331, 1
        %s542 = smul.addr %s541, 8
        %s543 = scalar_lea.vmem [#allocation10], %s542
        %p544 = pneg %p370
        %p545 = pneg %p367
        %s546 = sand.u32 %s357, 1
        %s547 = scalar_lea.sflag [#allocation12], %s546
        %s548 = sand.u32 %s357, 1
        %s549 = smul.addr %s548, 8
        %s550 = scalar_lea.vmem [#allocation11], %s549
        %p551 = scmp.lt.s32.totalorder %s35, 1
        %s552 = scalar_select %p551, %s35, 1
        %s553 = smul.addr %s552, 8
        %s554 = scalar_lea.vmem %s0, %s553
        %p555 = scmp.lt.s32.totalorder %s35, 1
        %s556 = scalar_select %p555, %s35, 1
        %s557 = smul.addr %s556, 4
        %s558 = scalar_lea.vmem %s1, %s557
        %p559 = scmp.lt.s32.totalorder %s35, 1
        %s560 = scalar_select %p559, %s35, 1
        %s561 = smul.addr %s560, 4
        %s562 = scalar_lea.vmem %s2, %s561
        %v564 = vld [vmem:[%s554] sm:$0xff]
        %v565 = vld [vmem:[%s558] sm:$0xf]
        %v566 = vld [vmem:[%s562] sm:$0xf]
        %v567 = vld [vmem:[#allocation2] sm:$0xf]
        %v568 = vld [vmem:[#allocation5] sm:$0x1]
        %v570 = vlaneseq
        %v571 = vshrl.u32 %v570, 7
        %v572 = vsub.s32 0, %v571
        %v573 = vrot.slane %v568, %v572
        %vm575 = vcmask 31744
        %v577 = vsel %vm575, %v564, 0
        %vm579 = vcmask 1043456
        %v581 = vsel %vm579, %v567, 0
        %583 = vmatprep.subr.mxu0 0.0
        %584 = vmatpush1.msra.mxu0 %v581
        %585 = vmatprep.subr.mxu0 0.0
        %586 = vmatpush1.msra.mxu0 0.0
        %587 = vmatprep.subr.mxu0 0.0
        %588 = vmatpush1.msra.mxu0 0.0
        %589 = vmatprep.subr.mxu0 0.0
        %590 = vmatpush1.msra.mxu0 0.0
        %591 = vmatprep.subr.mxu0 0.0
        %592 = vmatpush1.msra.mxu0 0.0
        %593 = vmatprep.subr.mxu0 0.0
        %594 = vmatpush1.msra.mxu0 0.0
        %595 = vmatprep.subr.mxu0 0.0
        %596 = vmatpush1.msra.mxu0 0.0
        %597 = vmatprep.subr.mxu0 0.0
        %598 = vmatpush1.msra.mxu0 0.0
        %599 = vmatprep.subr.mxu0 0.0
        %600 = vmatpush1.msra.mxu0 0.0
        %601 = vmatprep.subr.mxu0 0.0
        %602 = vmatpush1.msra.mxu0 0.0
        %603 = vmatprep.subr.mxu0 0.0
        %604 = vmatpush1.msra.mxu0 0.0
        %605 = vmatprep.subr.mxu0 0.0
        %606 = vmatpush1.msra.mxu0 0.0
        %607 = vmatprep.subr.mxu0 0.0
        %608 = vmatpush1.msra.mxu0 0.0
        %609 = vmatprep.subr.mxu0 0.0
        %610 = vmatpush1.msra.mxu0 0.0
        %611 = vmatprep.subr.mxu0 0.0
        %612 = vmatpush1.msra.mxu0 0.0
        %613 = vmatprep.subr.mxu0 0.0
        %614 = vmatpush1.msra.mxu0 0.0
        %615 = vmatprep.subr.mxu0 0.0
        %616 = vmatpush1.msra.mxu0 0.0
        %617 = vmatprep.subr.mxu0 0.0
        %618 = vmatpush1.msra.mxu0 0.0
        %619 = vmatprep.subr.mxu0 0.0
        %620 = vmatpush1.msra.mxu0 0.0
        %621 = vmatprep.subr.mxu0 0.0
        %622 = vmatpush1.msra.mxu0 0.0
        %623 = vmatprep.subr.mxu0 0.0
        %624 = vmatpush1.msra.mxu0 0.0
        %625 = vmatprep.subr.mxu0 0.0
        %626 = vmatpush1.msra.mxu0 0.0
        %627 = vmatprep.subr.mxu0 0.0
        %628 = vmatpush1.msra.mxu0 0.0
        %629 = vmatprep.subr.mxu0 0.0
        %630 = vmatpush1.msra.mxu0 0.0
        %631 = vmatprep.subr.mxu0 0.0
        %632 = vmatpush1.msra.mxu0 0.0
        %633 = vmatprep.subr.mxu0 0.0
        %634 = vmatpush1.msra.mxu0 0.0
        %635 = vmatprep.subr.mxu0 0.0
        %636 = vmatpush1.msra.mxu0 0.0
        %637 = vmatprep.subr.mxu0 0.0
        %638 = vmatpush1.msra.mxu0 0.0
        %639 = vmatprep.subr.mxu0 0.0
        %640 = vmatpush1.msra.mxu0 0.0
        %641 = vmatprep.subr.mxu0 0.0
        %642 = vmatpush1.msra.mxu0 0.0
        %643 = vmatprep.subr.mxu0 0.0
        %644 = vmatpush1.msra.mxu0 0.0
        %645 = vmatprep.subr.mxu0 0.0
        %646 = vmatpush1.msra.mxu0 0.0
        %647 = vmatprep.mubr.f32.mxu0 0.0
        %648 = vmatmul.mubr.f32.gmra.mrb[0].mxu0 %v577
        %v649 = vpop.f32.mrb[0].mxu0
        %v650 = vadd.f32 %v573, %v649
        %v651 = vpop.f32.mrb[0].mxu0
        %652 = vdwg.mxu0
        %v653 = vpack.c.bf16 %v650, %v650
        %v654 = vld [vmem:[#allocation7] sm:$0xf]
        %v655 = vld [vmem:[#allocation7 + $0x4] sm:$0xf]
        %v656 = vld [vmem:[#allocation7 + $0x8] sm:$0xf]
        %v657 = vld [vmem:[#allocation7 + $0xc] sm:$0xf]
        %v662 = vunpack.c.l.b16 %v654
        %v663 = vunpack.c.l.b16 %v655
        %v664 = vunpack.c.l.b16 %v656
        %v665 = vunpack.c.l.b16 %v657
        %v666 = vpack.c.b16 %v663, %v662
        %v667 = vpack.c.b16 %v665, %v664
        %vm670 = vcmask 261120
        %v672 = vsel %vm670, %v653, 0
        %674 = vmatprep.subr.bf16.mxu0 0
        %675 = vmatpush1.bf16.msra.mxu0 %v666
        %676 = vmatprep.subr.bf16.mxu0 0
        %677 = vmatpush1.bf16.msra.mxu0 %v667
        %678 = vmatprep.subr.bf16.mxu0 0
        %679 = vmatpush1.bf16.msra.mxu0 0
        %680 = vmatprep.subr.bf16.mxu0 0
        %681 = vmatpush1.bf16.msra.mxu0 0
        %682 = vmatprep.subr.bf16.mxu0 0
        %683 = vmatpush1.bf16.msra.mxu0 0
        %684 = vmatprep.subr.bf16.mxu0 0
        %685 = vmatpush1.bf16.msra.mxu0 0
        %686 = vmatprep.subr.bf16.mxu0 0
        %687 = vmatpush1.bf16.msra.mxu0 0
        %688 = vmatprep.subr.bf16.mxu0 0
        %689 = vmatpush1.bf16.msra.mxu0 0
        %690 = vmatprep.subr.bf16.mxu0 0
        %691 = vmatpush1.bf16.msra.mxu0 0
        %692 = vmatprep.subr.bf16.mxu0 0
        %693 = vmatpush1.bf16.msra.mxu0 0
        %694 = vmatprep.subr.bf16.mxu0 0
        %695 = vmatpush1.bf16.msra.mxu0 0
        %696 = vmatprep.subr.bf16.mxu0 0
        %697 = vmatpush1.bf16.msra.mxu0 0
        %698 = vmatprep.subr.bf16.mxu0 0
        %699 = vmatpush1.bf16.msra.mxu0 0
        %700 = vmatprep.subr.bf16.mxu0 0
        %701 = vmatpush1.bf16.msra.mxu0 0
        %702 = vmatprep.subr.bf16.mxu0 0
        %703 = vmatpush1.bf16.msra.mxu0 0
        %704 = vmatprep.subr.bf16.mxu0 0
        %705 = vmatpush1.bf16.msra.mxu0 0
        %706 = vmatprep.mubr.bf16.mxu0 0
        %707 = vmatmul.mubr.bf16.gmra.mrb[0].mxu0 %v672
        %v708 = vpop.f32.mrb[0].mxu0
        %v709 = vadd.f32 0.0, %v708
        %v710 = vpop.f32.mrb[0].mxu0
        %v711 = vpop.f32.mrb[0].mxu0
        %v712 = vpop.f32.mrb[0].mxu0
        %713 = vdwg.mxu0
        %v714 = vadd.f32 %v709, 0.0
        %v715 = vld [vmem:[%s6] sm:$0x1]
        %v717 = vlaneseq
        %v718 = vshrl.u32 %v717, 7
        %v719 = vsub.s32 0, %v718
        %v720 = vrot.slane %v715, %v719
        %v722 = vadd.f32 %v709, %v720
        %v723 = vmax.f32 %v722, 0.0
        %v724 = vpack.c.bf16 %v723, %v723
        %vm725 = vcmask 64512
        %v727 = vsel %vm725, %v565, 0
        %v730 = vsel %vm579, %v724, 0
        %732 = vmatprep.subr.bf16.mxu0 0
        %733 = vmatpush1.bf16.msra.mxu0 %v730
        %734 = vmatprep.subr.bf16.mxu0 0
        %735 = vmatpush1.bf16.msra.mxu0 0
        %736 = vmatprep.subr.bf16.mxu0 0
        %737 = vmatpush1.bf16.msra.mxu0 0
        %738 = vmatprep.subr.bf16.mxu0 0
        %739 = vmatpush1.bf16.msra.mxu0 0
        %740 = vmatprep.subr.bf16.mxu0 0
        %741 = vmatpush1.bf16.msra.mxu0 0
        %742 = vmatprep.subr.bf16.mxu0 0
        %743 = vmatpush1.bf16.msra.mxu0 0
        %744 = vmatprep.subr.bf16.mxu0 0
        %745 = vmatpush1.bf16.msra.mxu0 0
        %746 = vmatprep.subr.bf16.mxu0 0
        %747 = vmatpush1.bf16.msra.mxu0 0
        %748 = vmatprep.subr.bf16.mxu0 0
        %749 = vmatpush1.bf16.msra.mxu0 0
        %750 = vmatprep.subr.bf16.mxu0 0
        %751 = vmatpush1.bf16.msra.mxu0 0
        %752 = vmatprep.subr.bf16.mxu0 0
        %753 = vmatpush1.bf16.msra.mxu0 0
        %754 = vmatprep.subr.bf16.mxu0 0
        %755 = vmatpush1.bf16.msra.mxu0 0
        %756 = vmatprep.subr.bf16.mxu0 0
        %757 = vmatpush1.bf16.msra.mxu0 0
        %758 = vmatprep.subr.bf16.mxu0 0
        %759 = vmatpush1.bf16.msra.mxu0 0
        %760 = vmatprep.subr.bf16.mxu0 0
        %761 = vmatpush1.bf16.msra.mxu0 0
        %762 = vmatprep.subr.bf16.mxu0 0
        %763 = vmatpush1.bf16.msra.mxu0 0
        %764 = vmatprep.mubr.bf16.mxu0 0
        %765 = vmatmul.mubr.bf16.gmra.mrb[0].mxu0 %v727
        %v766 = vpop.f32.mrb[0].mxu0
        %v767 = vadd.f32 0.0, %v766
        %v768 = vpop.f32.mrb[0].mxu0
        %v769 = vpop.f32.mrb[0].mxu0
        %v770 = vpop.f32.mrb[0].mxu0
        %771 = vdwg.mxu0
        %v772 = vpack.c.bf16 %v767, %v767
        %v773 = vld [vmem:[%s7] sm:$0xf]
        %v774 = vld [vmem:[%s7 + $0x4] sm:$0xf]
        %v775 = vld [vmem:[%s7 + $0x8] sm:$0xf]
        %v776 = vld [vmem:[%s7 + $0xc] sm:$0xf]
        %v781 = vunpack.c.l.b16 %v773
        %v782 = vunpack.c.l.b16 %v774
        %v783 = vunpack.c.l.b16 %v775
        %v784 = vunpack.c.l.b16 %v776
        %v785 = vpack.c.b16 %v782, %v781
        %v786 = vpack.c.b16 %v784, %v783
        %v790 = vsel %vm670, %v772, 0
        %792 = vmatprep.subr.bf16.mxu0 0
        %793 = vmatpush1.bf16.msra.mxu0 %v785
        %794 = vmatprep.subr.bf16.mxu0 0
        %795 = vmatpush1.bf16.msra.mxu0 %v786
        %796 = vmatprep.subr.bf16.mxu0 0
        %797 = vmatpush1.bf16.msra.mxu0 0
        %798 = vmatprep.subr.bf16.mxu0 0
        %799 = vmatpush1.bf16.msra.mxu0 0
        %800 = vmatprep.subr.bf16.mxu0 0
        %801 = vmatpush1.bf16.msra.mxu0 0
        %802 = vmatprep.subr.bf16.mxu0 0
        %803 = vmatpush1.bf16.msra.mxu0 0
        %804 = vmatprep.subr.bf16.mxu0 0
        %805 = vmatpush1.bf16.msra.mxu0 0
        %806 = vmatprep.subr.bf16.mxu0 0
        %807 = vmatpush1.bf16.msra.mxu0 0
        %808 = vmatprep.subr.bf16.mxu0 0
        %809 = vmatpush1.bf16.msra.mxu0 0
        %810 = vmatprep.subr.bf16.mxu0 0
        %811 = vmatpush1.bf16.msra.mxu0 0
        %812 = vmatprep.subr.bf16.mxu0 0
        %813 = vmatpush1.bf16.msra.mxu0 0
        %814 = vmatprep.subr.bf16.mxu0 0
        %815 = vmatpush1.bf16.msra.mxu0 0
        %816 = vmatprep.subr.bf16.mxu0 0
        %817 = vmatpush1.bf16.msra.mxu0 0
        %818 = vmatprep.subr.bf16.mxu0 0
        %819 = vmatpush1.bf16.msra.mxu0 0
        %820 = vmatprep.subr.bf16.mxu0 0
        %821 = vmatpush1.bf16.msra.mxu0 0
        %822 = vmatprep.subr.bf16.mxu0 0
        %823 = vmatpush1.bf16.msra.mxu0 0
        %824 = vmatprep.mubr.bf16.mxu0 0
        %825 = vmatmul.mubr.bf16.gmra.mrb[0].mxu0 %v790
        %v826 = vpop.f32.mrb[0].mxu0
        %v827 = vadd.f32 0.0, %v826
        %v828 = vpop.f32.mrb[0].mxu0
        %v829 = vpop.f32.mrb[0].mxu0
        %v830 = vpop.f32.mrb[0].mxu0
        %831 = vdwg.mxu0
        %833 = vrot.lane.b32.xlu0 %v827, 32
        %v834 = vpop.permute.xlu0 %833
        %v836 = vadd.f32 %v709, %v834
        %v837 = vld [vmem:[%s8] sm:$0x1]
        %v839 = vlaneseq
        %v840 = vshrl.u32 %v839, 7
        %v841 = vsub.s32 0, %v840
        %v842 = vrot.slane %v837, %v841
        %843 = vrot.lane.b32.xlu0 %v842, 32
        %v844 = vpop.permute.xlu0 %843
        %v846 = vadd.f32 %v836, %v844
        %v847 = vmax.f32 %v846, 0.0
        %v848 = vpack.c.bf16 %v847, %v847
        %v849 = vld [vmem:[#allocation8] sm:$0xf]
        %v850 = vld [vmem:[#allocation8 + $0x4] sm:$0xf]
        %v851 = vld [vmem:[#allocation8 + $0x8] sm:$0xf]
        %v852 = vld [vmem:[#allocation8 + $0xc] sm:$0xf]
        %v853 = vld [vmem:[%s10] sm:$0x1]
        %v855 = vlaneseq
        %v856 = vshrl.u32 %v855, 7
        %v857 = vsub.s32 0, %v856
        %v858 = vrot.slane %v853, %v857
        %861 = vrot.lane.b32.xlu0 %v848, 96
        %v862 = vpop.permute.xlu0 %861
        %v867 = vunpack.c.l.b16 %v849
        %v868 = vunpack.c.l.b16 %v850
        %v869 = vunpack.c.l.b16 %v851
        %v870 = vunpack.c.l.b16 %v852
        %v871 = vpack.c.b16 %v868, %v867
        %v872 = vpack.c.b16 %v870, %v869
        %v876 = vsel %vm670, %v862, 0
        %878 = vmatprep.subr.bf16.mxu0 0
        %879 = vmatpush1.bf16.msra.mxu0 %v871
        %880 = vmatprep.subr.bf16.mxu0 0
        %881 = vmatpush1.bf16.msra.mxu0 %v872
        %882 = vmatprep.subr.bf16.mxu0 0
        %883 = vmatpush1.bf16.msra.mxu0 0
        %884 = vmatprep.subr.bf16.mxu0 0
        %885 = vmatpush1.bf16.msra.mxu0 0
        %886 = vmatprep.subr.bf16.mxu0 0
        %887 = vmatpush1.bf16.msra.mxu0 0
        %888 = vmatprep.subr.bf16.mxu0 0
        %889 = vmatpush1.bf16.msra.mxu0 0
        %890 = vmatprep.subr.bf16.mxu0 0
        %891 = vmatpush1.bf16.msra.mxu0 0
        %892 = vmatprep.subr.bf16.mxu0 0
        %893 = vmatpush1.bf16.msra.mxu0 0
        %894 = vmatprep.subr.bf16.mxu0 0
        %895 = vmatpush1.bf16.msra.mxu0 0
        %896 = vmatprep.subr.bf16.mxu0 0
        %897 = vmatpush1.bf16.msra.mxu0 0
        %898 = vmatprep.subr.bf16.mxu0 0
        %899 = vmatpush1.bf16.msra.mxu0 0
        %900 = vmatprep.subr.bf16.mxu0 0
        %901 = vmatpush1.bf16.msra.mxu0 0
        %902 = vmatprep.subr.bf16.mxu0 0
        %903 = vmatpush1.bf16.msra.mxu0 0
        %904 = vmatprep.subr.bf16.mxu0 0
        %905 = vmatpush1.bf16.msra.mxu0 0
        %906 = vmatprep.subr.bf16.mxu0 0
        %907 = vmatpush1.bf16.msra.mxu0 0
        %908 = vmatprep.subr.bf16.mxu0 0
        %909 = vmatpush1.bf16.msra.mxu0 0
        %910 = vmatprep.mubr.bf16.mxu0 0
        %911 = vmatmul.mubr.bf16.gmra.mrb[0].mxu0 %v876
        %v912 = vpop.f32.mrb[0].mxu0
        %v913 = vadd.f32 %v858, %v912
        %v914 = vpop.f32.mrb[0].mxu0
        %v915 = vpop.f32.mrb[0].mxu0
        %v916 = vpop.f32.mrb[0].mxu0
        %917 = vdwg.mxu0
        %v918 = vmax.f32 %v913, 0.0
        %v919 = vpack.c.bf16 %v918, %v918
        %s920 = scalar_lea.vmem [#allocation7], 16
        %v921 = vld [vmem:[%s920] sm:$0xf]
        %v922 = vld [vmem:[%s920 + $0x4] sm:$0xf]
        %v923 = vld [vmem:[%s920 + $0x8] sm:$0xf]
        %v924 = vld [vmem:[%s920 + $0xc] sm:$0xf]
        %v929 = vunpack.c.l.b16 %v921
        %v930 = vunpack.c.l.b16 %v922
        %v931 = vunpack.c.l.b16 %v923
        %v932 = vunpack.c.l.b16 %v924
        %v933 = vpack.c.b16 %v930, %v929
        %v934 = vpack.c.b16 %v932, %v931
        %v938 = vsel %vm670, %v919, 0
        %940 = vmatprep.subr.bf16.mxu0 0
        %941 = vmatpush1.bf16.msra.mxu0 %v933
        %942 = vmatprep.subr.bf16.mxu0 0
        %943 = vmatpush1.bf16.msra.mxu0 %v934
        %944 = vmatprep.subr.bf16.mxu0 0
        %945 = vmatpush1.bf16.msra.mxu0 0
        %946 = vmatprep.subr.bf16.mxu0 0
        %947 = vmatpush1.bf16.msra.mxu0 0
        %948 = vmatprep.subr.bf16.mxu0 0
        %949 = vmatpush1.bf16.msra.mxu0 0
        %950 = vmatprep.subr.bf16.mxu0 0
        %951 = vmatpush1.bf16.msra.mxu0 0
        %952 = vmatprep.subr.bf16.mxu0 0
        %953 = vmatpush1.bf16.msra.mxu0 0
        %954 = vmatprep.subr.bf16.mxu0 0
        %955 = vmatpush1.bf16.msra.mxu0 0
        %956 = vmatprep.subr.bf16.mxu0 0
        %957 = vmatpush1.bf16.msra.mxu0 0
        %958 = vmatprep.subr.bf16.mxu0 0
        %959 = vmatpush1.bf16.msra.mxu0 0
        %960 = vmatprep.subr.bf16.mxu0 0
        %961 = vmatpush1.bf16.msra.mxu0 0
        %962 = vmatprep.subr.bf16.mxu0 0
        %963 = vmatpush1.bf16.msra.mxu0 0
        %964 = vmatprep.subr.bf16.mxu0 0
        %965 = vmatpush1.bf16.msra.mxu0 0
        %966 = vmatprep.subr.bf16.mxu0 0
        %967 = vmatpush1.bf16.msra.mxu0 0
        %968 = vmatprep.subr.bf16.mxu0 0
        %969 = vmatpush1.bf16.msra.mxu0 0
        %970 = vmatprep.subr.bf16.mxu0 0
        %971 = vmatpush1.bf16.msra.mxu0 0
        %972 = vmatprep.mubr.bf16.mxu0 0
        %973 = vmatmul.mubr.bf16.gmra.mrb[0].mxu0 %v938
        %v974 = vpop.f32.mrb[0].mxu0
        %v975 = vadd.f32 0.0, %v974
        %v976 = vpop.f32.mrb[0].mxu0
        %v977 = vpop.f32.mrb[0].mxu0
        %v978 = vpop.f32.mrb[0].mxu0
        %979 = vdwg.mxu0
        %v980 = vadd.f32 %v714, %v975
        %s981 = scalar_lea.vmem %s6, 1
        %v982 = vld [vmem:[%s981] sm:$0x1]
        %v984 = vlaneseq
        %v985 = vshrl.u32 %v984, 7
        %v986 = vsub.s32 0, %v985
        %v987 = vrot.slane %v982, %v986
        %v989 = vadd.f32 %v975, %v987
        %v990 = vmax.f32 %v989, 0.0
        %v991 = vpack.c.bf16 %v990, %v990
        %v993 = vsel %vm579, %v991, 0
        %995 = vmatprep.subr.bf16.mxu0 0
        %996 = vmatpush1.bf16.msra.mxu0 %v993
        %997 = vmatprep.subr.bf16.mxu0 0
        %998 = vmatpush1.bf16.msra.mxu0 0
        %999 = vmatprep.subr.bf16.mxu0 0
        %1000 = vmatpush1.bf16.msra.mxu0 0
        %1001 = vmatprep.subr.bf16.mxu0 0
        %1002 = vmatpush1.bf16.msra.mxu0 0
        %1003 = vmatprep.subr.bf16.mxu0 0
        %1004 = vmatpush1.bf16.msra.mxu0 0
        %1005 = vmatprep.subr.bf16.mxu0 0
        %1006 = vmatpush1.bf16.msra.mxu0 0
        %1007 = vmatprep.subr.bf16.mxu0 0
        %1008 = vmatpush1.bf16.msra.mxu0 0
        %1009 = vmatprep.subr.bf16.mxu0 0
        %1010 = vmatpush1.bf16.msra.mxu0 0
        %1011 = vmatprep.subr.bf16.mxu0 0
        %1012 = vmatpush1.bf16.msra.mxu0 0
        %1013 = vmatprep.subr.bf16.mxu0 0
        %1014 = vmatpush1.bf16.msra.mxu0 0
        %1015 = vmatprep.subr.bf16.mxu0 0
        %1016 = vmatpush1.bf16.msra.mxu0 0
        %1017 = vmatprep.subr.bf16.mxu0 0
        %1018 = vmatpush1.bf16.msra.mxu0 0
        %1019 = vmatprep.subr.bf16.mxu0 0
        %1020 = vmatpush1.bf16.msra.mxu0 0
        %1021 = vmatprep.subr.bf16.mxu0 0
        %1022 = vmatpush1.bf16.msra.mxu0 0
        %1023 = vmatprep.subr.bf16.mxu0 0
        %1024 = vmatpush1.bf16.msra.mxu0 0
        %1025 = vmatprep.subr.bf16.mxu0 0
        %1026 = vmatpush1.bf16.msra.mxu0 0
        %1027 = vmatprep.mubr.bf16.mxu0 0
        %1028 = vmatmul.mubr.bf16.gmra.mrb[0].mxu0 %v727
        %v1029 = vpop.f32.mrb[0].mxu0
        %v1030 = vadd.f32 0.0, %v1029
        %v1031 = vpop.f32.mrb[0].mxu0
        %v1032 = vpop.f32.mrb[0].mxu0
        %v1033 = vpop.f32.mrb[0].mxu0
        %1034 = vdwg.mxu0
        %v1035 = vpack.c.bf16 %v1030, %v1030
        %s1036 = scalar_lea.vmem %s7, 16
        %v1037 = vld [vmem:[%s1036] sm:$0xf]
        %v1038 = vld [vmem:[%s1036 + $0x4] sm:$0xf]
        %v1039 = vld [vmem:[%s1036 + $0x8] sm:$0xf]
        %v1040 = vld [vmem:[%s1036 + $0xc] sm:$0xf]
        %v1045 = vunpack.c.l.b16 %v1037
        %v1046 = vunpack.c.l.b16 %v1038
        %v1047 = vunpack.c.l.b16 %v1039
        %v1048 = vunpack.c.l.b16 %v1040
        %v1049 = vpack.c.b16 %v1046, %v1045
        %v1050 = vpack.c.b16 %v1048, %v1047
        %v1054 = vsel %vm670, %v1035, 0
        %1056 = vmatprep.subr.bf16.mxu0 0
        %1057 = vmatpush1.bf16.msra.mxu0 %v1049
        %1058 = vmatprep.subr.bf16.mxu0 0
        %1059 = vmatpush1.bf16.msra.mxu0 %v1050
        %1060 = vmatprep.subr.bf16.mxu0 0
        %1061 = vmatpush1.bf16.msra.mxu0 0
        %1062 = vmatprep.subr.bf16.mxu0 0
        %1063 = vmatpush1.bf16.msra.mxu0 0
        %1064 = vmatprep.subr.bf16.mxu0 0
        %1065 = vmatpush1.bf16.msra.mxu0 0
        %1066 = vmatprep.subr.bf16.mxu0 0
        %1067 = vmatpush1.bf16.msra.mxu0 0
        %1068 = vmatprep.subr.bf16.mxu0 0
        %1069 = vmatpush1.bf16.msra.mxu0 0
        %1070 = vmatprep.subr.bf16.mxu0 0
        %1071 = vmatpush1.bf16.msra.mxu0 0
        %1072 = vmatprep.subr.bf16.mxu0 0
        %1073 = vmatpush1.bf16.msra.mxu0 0
        %1074 = vmatprep.subr.bf16.mxu0 0
        %1075 = vmatpush1.bf16.msra.mxu0 0
        %1076 = vmatprep.subr.bf16.mxu0 0
        %1077 = vmatpush1.bf16.msra.mxu0 0
        %1078 = vmatprep.subr.bf16.mxu0 0
        %1079 = vmatpush1.bf16.msra.mxu0 0
        %1080 = vmatprep.subr.bf16.mxu0 0
        %1081 = vmatpush1.bf16.msra.mxu0 0
        %1082 = vmatprep.subr.bf16.mxu0 0
        %1083 = vmatpush1.bf16.msra.mxu0 0
        %1084 = vmatprep.subr.bf16.mxu0 0
        %1085 = vmatpush1.bf16.msra.mxu0 0
        %1086 = vmatprep.subr.bf16.mxu0 0
        %1087 = vmatpush1.bf16.msra.mxu0 0
        %1088 = vmatprep.mubr.bf16.mxu0 0
        %1089 = vmatmul.mubr.bf16.gmra.mrb[0].mxu0 %v1054
        %v1090 = vpop.f32.mrb[0].mxu0
        %v1091 = vadd.f32 0.0, %v1090
        %v1092 = vpop.f32.mrb[0].mxu0
        %v1093 = vpop.f32.mrb[0].mxu0
        %v1094 = vpop.f32.mrb[0].mxu0
        %1095 = vdwg.mxu0
        %1097 = vrot.lane.b32.xlu0 %v1091, 32
        %v1098 = vpop.permute.xlu0 %1097
        %v1100 = vadd.f32 %v975, %v1098
        %s1101 = scalar_lea.vmem %s8, 1
        %v1102 = vld [vmem:[%s1101] sm:$0x1]
        %v1104 = vlaneseq
        %v1105 = vshrl.u32 %v1104, 7
        %v1106 = vsub.s32 0, %v1105
        %v1107 = vrot.slane %v1102, %v1106
        %1108 = vrot.lane.b32.xlu0 %v1107, 32
        %v1109 = vpop.permute.xlu0 %1108
        %v1111 = vadd.f32 %v1100, %v1109
        %v1112 = vmax.f32 %v1111, 0.0
        %v1113 = vpack.c.bf16 %v1112, %v1112
        %s1114 = scalar_lea.vmem [#allocation8], 16
        %v1115 = vld [vmem:[%s1114] sm:$0xf]
        %v1116 = vld [vmem:[%s1114 + $0x4] sm:$0xf]
        %v1117 = vld [vmem:[%s1114 + $0x8] sm:$0xf]
        %v1118 = vld [vmem:[%s1114 + $0xc] sm:$0xf]
        %s1119 = scalar_lea.vmem %s10, 1
        %v1120 = vld [vmem:[%s1119] sm:$0x1]
        %v1122 = vlaneseq
        %v1123 = vshrl.u32 %v1122, 7
        %v1124 = vsub.s32 0, %v1123
        %v1125 = vrot.slane %v1120, %v1124
        %1128 = vrot.lane.b32.xlu0 %v1113, 96
        %v1129 = vpop.permute.xlu0 %1128
        %v1134 = vunpack.c.l.b16 %v1115
        %v1135 = vunpack.c.l.b16 %v1116
        %v1136 = vunpack.c.l.b16 %v1117
        %v1137 = vunpack.c.l.b16 %v1118
        %v1138 = vpack.c.b16 %v1135, %v1134
        %v1139 = vpack.c.b16 %v1137, %v1136
        %v1143 = vsel %vm670, %v1129, 0
        %1145 = vmatprep.subr.bf16.mxu0 0
        %1146 = vmatpush1.bf16.msra.mxu0 %v1138
        %1147 = vmatprep.subr.bf16.mxu0 0
        %1148 = vmatpush1.bf16.msra.mxu0 %v1139
        %1149 = vmatprep.subr.bf16.mxu0 0
        %1150 = vmatpush1.bf16.msra.mxu0 0
        %1151 = vmatprep.subr.bf16.mxu0 0
        %1152 = vmatpush1.bf16.msra.mxu0 0
        %1153 = vmatprep.subr.bf16.mxu0 0
        %1154 = vmatpush1.bf16.msra.mxu0 0
        %1155 = vmatprep.subr.bf16.mxu0 0
        %1156 = vmatpush1.bf16.msra.mxu0 0
        %1157 = vmatprep.subr.bf16.mxu0 0
        %1158 = vmatpush1.bf16.msra.mxu0 0
        %1159 = vmatprep.subr.bf16.mxu0 0
        %1160 = vmatpush1.bf16.msra.mxu0 0
        %1161 = vmatprep.subr.bf16.mxu0 0
        %1162 = vmatpush1.bf16.msra.mxu0 0
        %1163 = vmatprep.subr.bf16.mxu0 0
        %1164 = vmatpush1.bf16.msra.mxu0 0
        %1165 = vmatprep.subr.bf16.mxu0 0
        %1166 = vmatpush1.bf16.msra.mxu0 0
        %1167 = vmatprep.subr.bf16.mxu0 0
        %1168 = vmatpush1.bf16.msra.mxu0 0
        %1169 = vmatprep.subr.bf16.mxu0 0
        %1170 = vmatpush1.bf16.msra.mxu0 0
        %1171 = vmatprep.subr.bf16.mxu0 0
        %1172 = vmatpush1.bf16.msra.mxu0 0
        %1173 = vmatprep.subr.bf16.mxu0 0
        %1174 = vmatpush1.bf16.msra.mxu0 0
        %1175 = vmatprep.subr.bf16.mxu0 0
        %1176 = vmatpush1.bf16.msra.mxu0 0
        %1177 = vmatprep.mubr.bf16.mxu0 0
        %1178 = vmatmul.mubr.bf16.gmra.mrb[0].mxu0 %v1143
        %v1179 = vpop.f32.mrb[0].mxu0
        %v1180 = vadd.f32 %v1125, %v1179
        %v1181 = vpop.f32.mrb[0].mxu0
        %v1182 = vpop.f32.mrb[0].mxu0
        %v1183 = vpop.f32.mrb[0].mxu0
        %1184 = vdwg.mxu0
        %v1185 = vmax.f32 %v1180, 0.0
        %v1186 = vpack.c.bf16 %v1185, %v1185
        %s1187 = scalar_lea.vmem [#allocation7], 32
        %v1188 = vld [vmem:[%s1187] sm:$0xf]
        %v1189 = vld [vmem:[%s1187 + $0x4] sm:$0xf]
        %v1190 = vld [vmem:[%s1187 + $0x8] sm:$0xf]
        %v1191 = vld [vmem:[%s1187 + $0xc] sm:$0xf]
        %v1196 = vunpack.c.l.b16 %v1188
        %v1197 = vunpack.c.l.b16 %v1189
        %v1198 = vunpack.c.l.b16 %v1190
        %v1199 = vunpack.c.l.b16 %v1191
        %v1200 = vpack.c.b16 %v1197, %v1196
        %v1201 = vpack.c.b16 %v1199, %v1198
        %v1205 = vsel %vm670, %v1186, 0
        %1207 = vmatprep.subr.bf16.mxu0 0
        %1208 = vmatpush1.bf16.msra.mxu0 %v1200
        %1209 = vmatprep.subr.bf16.mxu0 0
        %1210 = vmatpush1.bf16.msra.mxu0 %v1201
        %1211 = vmatprep.subr.bf16.mxu0 0
        %1212 = vmatpush1.bf16.msra.mxu0 0
        %1213 = vmatprep.subr.bf16.mxu0 0
        %1214 = vmatpush1.bf16.msra.mxu0 0
        %1215 = vmatprep.subr.bf16.mxu0 0
        %1216 = vmatpush1.bf16.msra.mxu0 0
        %1217 = vmatprep.subr.bf16.mxu0 0
        %1218 = vmatpush1.bf16.msra.mxu0 0
        %1219 = vmatprep.subr.bf16.mxu0 0
        %1220 = vmatpush1.bf16.msra.mxu0 0
        %1221 = vmatprep.subr.bf16.mxu0 0
        %1222 = vmatpush1.bf16.msra.mxu0 0
        %1223 = vmatprep.subr.bf16.mxu0 0
        %1224 = vmatpush1.bf16.msra.mxu0 0
        %1225 = vmatprep.subr.bf16.mxu0 0
        %1226 = vmatpush1.bf16.msra.mxu0 0
        %1227 = vmatprep.subr.bf16.mxu0 0
        %1228 = vmatpush1.bf16.msra.mxu0 0
        %1229 = vmatprep.subr.bf16.mxu0 0
        %1230 = vmatpush1.bf16.msra.mxu0 0
        %1231 = vmatprep.subr.bf16.mxu0 0
        %1232 = vmatpush1.bf16.msra.mxu0 0
        %1233 = vmatprep.subr.bf16.mxu0 0
        %1234 = vmatpush1.bf16.msra.mxu0 0
        %1235 = vmatprep.subr.bf16.mxu0 0
        %1236 = vmatpush1.bf16.msra.mxu0 0
        %1237 = vmatprep.subr.bf16.mxu0 0
        %1238 = vmatpush1.bf16.msra.mxu0 0
        %1239 = vmatprep.mubr.bf16.mxu0 0
        %1240 = vmatmul.mubr.bf16.gmra.mrb[0].mxu0 %v1205
        %v1241 = vpop.f32.mrb[0].mxu0
        %v1242 = vadd.f32 0.0, %v1241
        %v1243 = vpop.f32.mrb[0].mxu0
        %v1244 = vpop.f32.mrb[0].mxu0
        %v1245 = vpop.f32.mrb[0].mxu0
        %1246 = vdwg.mxu0
        %v1247 = vadd.f32 %v980, %v1242
        %v1248 = vld [vmem:[%s11] sm:$0x1]
        %v1250 = vlaneseq
        %v1251 = vshrl.u32 %v1250, 7
        %v1252 = vsub.s32 0, %v1251
        %v1253 = vrot.slane %v1248, %v1252
        %1254 = vrot.lane.b32.xlu0 %v1253, 64
        %v1255 = vpop.permute.xlu0 %1254
        %v1257 = vadd.f32 %v1247, %v1255
        %v1258 = vpack.c.bf16 %v1247, %v1247
        %v1259 = vld [vmem:[%s12] sm:$0x1]
        %v1261 = vlaneseq
        %v1262 = vshrl.u32 %v1261, 7
        %v1263 = vsub.s32 0, %v1262
        %v1264 = vrot.slane %v1259, %v1263
        %1267 = vrot.lane.b32.xlu0 %v1258, 32
        %v1268 = vpop.permute.xlu0 %1267
        %v1270 = vsel %vm725, %v566, 0
        %v1273 = vsel %vm579, %v1268, 0
        %1275 = vmatprep.subr.bf16.mxu0 0
        %1276 = vmatpush1.bf16.msra.mxu0 %v1273
        %1277 = vmatprep.subr.bf16.mxu0 0
        %1278 = vmatpush1.bf16.msra.mxu0 0
        %1279 = vmatprep.subr.bf16.mxu0 0
        %1280 = vmatpush1.bf16.msra.mxu0 0
        %1281 = vmatprep.subr.bf16.mxu0 0
        %1282 = vmatpush1.bf16.msra.mxu0 0
        %1283 = vmatprep.subr.bf16.mxu0 0
        %1284 = vmatpush1.bf16.msra.mxu0 0
        %1285 = vmatprep.subr.bf16.mxu0 0
        %1286 = vmatpush1.bf16.msra.mxu0 0
        %1287 = vmatprep.subr.bf16.mxu0 0
        %1288 = vmatpush1.bf16.msra.mxu0 0
        %1289 = vmatprep.subr.bf16.mxu0 0
        %1290 = vmatpush1.bf16.msra.mxu0 0
        %1291 = vmatprep.subr.bf16.mxu0 0
        %1292 = vmatpush1.bf16.msra.mxu0 0
        %1293 = vmatprep.subr.bf16.mxu0 0
        %1294 = vmatpush1.bf16.msra.mxu0 0
        %1295 = vmatprep.subr.bf16.mxu0 0
        %1296 = vmatpush1.bf16.msra.mxu0 0
        %1297 = vmatprep.subr.bf16.mxu0 0
        %1298 = vmatpush1.bf16.msra.mxu0 0
        %1299 = vmatprep.subr.bf16.mxu0 0
        %1300 = vmatpush1.bf16.msra.mxu0 0
        %1301 = vmatprep.subr.bf16.mxu0 0
        %1302 = vmatpush1.bf16.msra.mxu0 0
        %1303 = vmatprep.subr.bf16.mxu0 0
        %1304 = vmatpush1.bf16.msra.mxu0 0
        %1305 = vmatprep.subr.bf16.mxu0 0
        %1306 = vmatpush1.bf16.msra.mxu0 0
        %1307 = vmatprep.mubr.bf16.mxu0 0
        %1308 = vmatmul.mubr.bf16.gmra.mrb[0].mxu0 %v1270
        %v1309 = vpop.f32.mrb[0].mxu0
        %v1310 = vadd.f32 %v1264, %v1309
        %v1311 = vpop.f32.mrb[0].mxu0
        %v1312 = vpop.f32.mrb[0].mxu0
        %v1313 = vpop.f32.mrb[0].mxu0
        %1314 = vdwg.mxu0
        %1316 = vrot.lane.b32.xlu0 %v1257, 64
        %v1317 = vpop.permute.xlu0 %1316
        %v1319 = vsel %vm670, %v1317, 0.0
        %1320 = vst [vmem:[%s543] sm:$0xff] %v1319
        %v1321 = vsel %vm670, %v1310, 0.0
        %1322 = vst [vmem:[%s550] sm:$0xff] %v1321
        %s1323 = sand.u32 %s331, 1
        %s1324 = scalar_lea.sflag [#allocation4], %s1323
        %s1325 = sand.u32 %s331, 1
        %s1326 = smul.addr %s1325, 8
        %s1327 = scalar_lea.vmem [#allocation10], %s1326
        %s1328 = sand.u32 %s357, 1
        %s1329 = scalar_lea.sflag [#allocation12], %s1328
        %s1330 = sand.u32 %s357, 1
        %s1331 = smul.addr %s1330, 8
        %s1332 = scalar_lea.vmem [#allocation11], %s1331
        // Predicated region
        $region89: #{tpu_custom_call.1} parent=71 // pred_check
          %p1333 = pneg %p341
        $region90: #{tpu_custom_call.1} parent=71 // pred_check_branch
          %1335 = sbr.rel (%p1333) target = $region92
        $region91: #{tpu_custom_call.1} parent=71 // pred_region
          %s1337 = ssub.s32 128, 128
          %1338 = vsyncadd %s1324, %s1337
          %s1339 = smul.addr %s35, 128
          %s1340 = scalar_lea.hbm %s13, %s1339
          %s1342 = sshll.u32 %s1327, 4
          %s1343 = int_to_ptr.vmem [resolvable:$true] %s1342
          %1345 = dma.vmem_to_hbm [thread:$0]  %s1343, 128, %s1340, %s1324
        $region92: #{tpu_custom_call.1} parent=71 // pred_fallthru
          _
        // Predicated region
        $region93: #{tpu_custom_call.1} parent=71 // pred_check
          %p1346 = pneg %p367
        $region94: #{tpu_custom_call.1} parent=71 // pred_check_branch
          %1348 = sbr.rel (%p1346) target = $region96
        $region95: #{tpu_custom_call.1} parent=71 // pred_region
          %s1350 = ssub.s32 128, 128
          %1351 = vsyncadd %s1329, %s1350
          %s1352 = smul.addr %s35, 128
          %s1353 = scalar_lea.hbm %s14, %s1352
          %s1355 = sshll.u32 %s1332, 4
          %s1356 = int_to_ptr.vmem [resolvable:$true] %s1355
          %1358 = dma.vmem_to_hbm [thread:$0]  %s1356, 128, %s1353, %s1329
        $region96: #{tpu_custom_call.1} parent=71 // pred_fallthru
          _
      $region72: #{tpu_custom_call.1} parent=5 // pred_fallthru
        _
      %p1359 = scmp.le.s32.totalorder 2, %s30
      // Predicated region
      $region97: #{tpu_custom_call.1} parent=5 // pred_check
        %p1360 = pneg %p1359
      $region98: #{tpu_custom_call.1} parent=5 // pred_check_branch
        %1362 = sbr.rel (%p1360) target = $region100
      $region99: #{tpu_custom_call.1} parent=5 // pred_region
        %s1363 = ssub.s32 %s30, 2
        // Predicated region
        $region101: #{tpu_custom_call.1} parent=99 // pred_check
          %p1364 = pneg %p347
        $region102: #{tpu_custom_call.1} parent=99 // pred_check_branch
          %1366 = sbr.rel (%p1364) target = $region104
        $region103: #{tpu_custom_call.1} parent=99 // pred_region
          %s1367 = sand.u32 %s332, 1
          %s1368 = scalar_lea.sflag [#allocation4], %s1367
          %s1369 = sand.u32 %s332, 1
          %s1370 = smul.addr %s1369, 8
          %s1371 = scalar_lea.vmem [#allocation10], %s1370
          %1372 = dma.done %s1368, 128
        $region104: #{tpu_custom_call.1} parent=99 // pred_fallthru
          _
        // Predicated region
        $region105: #{tpu_custom_call.1} parent=99 // pred_check
          %p1373 = pneg %p373
        $region106: #{tpu_custom_call.1} parent=99 // pred_check_branch
          %1375 = sbr.rel (%p1373) target = $region108
        $region107: #{tpu_custom_call.1} parent=99 // pred_region
          %s1376 = sand.u32 %s358, 1
          %s1377 = scalar_lea.sflag [#allocation12], %s1376
          %s1378 = sand.u32 %s358, 1
          %s1379 = smul.addr %s1378, 8
          %s1380 = scalar_lea.vmem [#allocation11], %s1379
          %1381 = dma.done %s1377, 128
        $region108: #{tpu_custom_call.1} parent=99 // pred_fallthru
          _
      $region100: #{tpu_custom_call.1} parent=5 // pred_fallthru
        _
    $region6: #{tpu_custom_call.1} parent=1 // loop_footer
      %s34 = sadd.s32 1, %s30
    $region7: #{tpu_custom_call.1} parent=1 // loop_footer_branch
      %29 = sbr.rel target = $region3
    $region8: #{tpu_custom_call.1} parent=1 // loop_exit
      _
    %1382 = vsyncpa [#allocation3], 1
    %s1383 = scalar_lea.sflag [#allocation3], 1
    %1384 = vsyncpa %s1383, 1
    %1385 = vsyncpa [#allocation6], 1
    %1386 = vsyncpa [#allocation9], 1
    %1387 = vsyncpa [#allocation4], 1
    %s1388 = scalar_lea.sflag [#allocation4], 1
    %1389 = vsyncpa %s1388, 1
    %1390 = vsyncpa [#allocation12], 1
    %s1391 = scalar_lea.sflag [#allocation12], 1
    %1392 = vsyncpa %s1391, 1

</llo_original>
